<compile_context>
chip_gen: v6e
topology: v6e:2x2x1
jax: 0.10.0
libtpu: 0.0.40
codegen_flags: <defaults>
</compile_context>

<pallas_src>
import functools

import numpy as np
import jax
import jax.numpy as jnp
from jax import lax
from jax.experimental import pallas as pl
from jax.experimental.pallas import tpu as pltpu

DILATIONS = (1, 2, 4, 8)
PAD = max(DILATIONS)                                   # H halo rows (8)
DYS = tuple(sorted({s * d for d in DILATIONS for s in (-1, 0, 1)}))  # 9 offsets


def _dpcb_kernel(xp_ref, tconv_ref, aatt_ref, eexp_ref, mfuse_ref,
                 bnsc_ref, bnsh_ref, alpha_ref, o_ref, *, H, pad, dys):
    # xp_ref:    (1, H + 2*pad, W*Cin)   row-padded, lane-dense input
    # tconv_ref: (9, W*Cin, 4*W*Ci)      per-row-offset fused conv matrices
    # aatt_ref:  (4*W*Ci, 4*W)           grouped attention reduction
    # eexp_ref:  (4*W, 4*W*Ci)           0/1 gate broadcast
    # mfuse_ref: (4*W*Ci, W*Cout)        grouped fuse + channel interleave
    # bnsc/bnsh/alpha: (1, W*Cout)       folded BN affine / PReLU slopes
    # o_ref:     (1, H, W*Cout)
    xp = xp_ref[0]                                     # (H+2*pad, W*Cin)
    ncat = tconv_ref.shape[-1]                         # 4*W*Ci

    # (1) down-proj + 4 dilated depthwise convs + avg-pool + HFF sums:
    #     one MXU contraction per distinct row offset (column offsets,
    #     channel mixing and the progressive sums live in tconv).
    cat = jnp.zeros((H, ncat), jnp.float32)
    for idx, dy in enumerate(dys):
        rows = xp[pad + dy: pad + dy + H, :]           # (H, W*Cin)
        cat = cat + jnp.dot(rows, tconv_ref[idx],
                            preferred_element_type=jnp.float32)

    # (2) grouped 1x1 attention, all 4 gates in one matmul + one sigmoid,
    #     then broadcast each gate over its Ci lanes with a 0/1 matmul.
    att = jax.nn.sigmoid(jnp.dot(cat, aatt_ref[...],
                                 preferred_element_type=jnp.float32))
    att = jnp.dot(att, eexp_ref[...], preferred_element_type=jnp.float32)
    gated = cat * (1.0 + att)                          # d_g + d_g * att_g

    # (3) grouped 1x1 fuse + per-pixel channel interleave in a single matmul;
    #     output already in lane-dense (H, W*Cout) order.
    out = jnp.dot(gated, mfuse_ref[...], preferred_element_type=jnp.float32)

    # (4) BatchNorm (inference, folded affine) + PReLU
    y = out * bnsc_ref[0] + bnsh_ref[0]
    y = jnp.where(y >= 0, y, y * alpha_ref[0])
    o_ref[0] = y.astype(o_ref.dtype)


def prepare_params(wdown, wds, watt, wfuse, bn_scale, bn_shift, alpha, W):
    """Fold the PyTorch-convention weights into lane-dense kernel matrices."""
    wdown = np.asarray(wdown, np.float64)              # (Ci, Cin, 1, 1)
    wds = [np.asarray(w, np.float64) for w in wds]     # 4 x (Ci, 1, 3, 3)
    watt = np.asarray(watt, np.float64)                # (4, Ci, 1, 1)
    wfuse = np.asarray(wfuse, np.float64)              # (Cout, Ci, 1, 1)
    Ci, Cin = wdown.shape[0], wdown.shape[1]
    Cout = 4 * Ci
    pad = PAD
    Wp = W + 2 * pad

    # 1x1 down-projection folded over W, W-halo columns left zero.
    Wdp = np.zeros((W * Cin, Wp * Ci), np.float64)
    for w in range(W):
        Wdp[w * Cin:(w + 1) * Cin,
            (pad + w) * Ci:(pad + w + 1) * Ci] = wdown[:, :, 0, 0].T

    # Per-row-offset tap matrices over the (padded) down-projected space.
    # conv_j contributes to branches b >= j (HFF progressive sums),
    # the 3x3 avg-pool (1/9, count_include_pad) contributes to all branches.
    T = {dy: np.zeros((Wp * Ci, 4 * W * Ci), np.float64) for dy in DYS}
    for j, d in enumerate(DILATIONS):
        for ky in range(3):
            dy = (ky - 1) * d
            for kx in range(3):
                dx = (kx - 1) * d
                for w in range(W):
                    src = pad + w + dx
                    for c in range(Ci):
                        tap = wds[j][c, 0, ky, kx]
                        for b in range(j, 4):
                            T[dy][src * Ci + c, b * W * Ci + w * Ci + c] += tap
    for ky in range(3):
        dy = ky - 1
        for kx in range(3):
            dx = kx - 1
            for w in range(W):
                src = pad + w + dx
                for c in range(Ci):
                    for b in range(4):
                        T[dy][src * Ci + c, b * W * Ci + w * Ci + c] += 1.0 / 9.0
    # Compose with the down-projection: a row-shifted slice of the padded
    # input times tconv[dy] directly yields that offset's contribution to the
    # branch-major HFF concat.
    tconv = np.stack([Wdp @ T[dy] for dy in DYS]).astype(np.float32)

    # Grouped 1x1 attention reduction + 0/1 gate-broadcast matrices.
    Aall = np.zeros((4 * W * Ci, 4 * W), np.float64)
    Eall = np.zeros((4 * W, 4 * W * Ci), np.float64)
    for b in range(4):
        for w in range(W):
            for c in range(Ci):
                Aall[b * W * Ci + w * Ci + c, b * W + w] = watt[b, c, 0, 0]
                Eall[b * W + w, b * W * Ci + w * Ci + c] = 1.0

    # Grouped 1x1 fuse + per-pixel channel interleave (branch-major lanes in,
    # pixel-major [w*Cout + g*Ci + co] lanes out).
    Mfuse = np.zeros((4 * W * Ci, W * Cout), np.float64)
    for b in range(4):
        for w in range(W):
            for ci in range(Ci):
                for co in range(Ci):
                    Mfuse[b * W * Ci + w * Ci + ci,
                          w * Cout + b * Ci + co] = wfuse[b * Ci + co, ci, 0, 0]

    bn_sc = np.tile(np.asarray(bn_scale, np.float32), W)[None, :]
    bn_sh = np.tile(np.asarray(bn_shift, np.float32), W)[None, :]
    al = np.tile(np.asarray(alpha, np.float32), W)[None, :]

    return dict(
        tconv=jnp.asarray(tconv),
        aatt=jnp.asarray(Aall.astype(np.float32)),
        eexp=jnp.asarray(Eall.astype(np.float32)),
        mfuse=jnp.asarray(Mfuse.astype(np.float32)),
        bn_sc=jnp.asarray(bn_sc),
        bn_sh=jnp.asarray(bn_sh),
        alpha=jnp.asarray(al),
    )


def dilated_parallel_conv_block(x_nchw, kp):
    """x_nchw: (N, Cin, H, W) float32.  Returns (N, Cout, H, W)."""
    N, Cin, H, W = x_nchw.shape
    Cout = kp["bn_sc"].shape[1] // W
    pad = PAD
    Hp = H + 2 * pad

    # Layout plumbing only: NCHW -> NHWC -> fold W into lanes -> pad H halo.
    x = jnp.transpose(x_nchw, (0, 2, 3, 1)).reshape(N, H, W * Cin)
    xp = jnp.pad(x, ((0, 0), (pad, pad), (0, 0)))

    kernel = functools.partial(_dpcb_kernel, H=H, pad=pad, dys=DYS)
    out = pl.pallas_call(
        kernel,
        out_shape=jax.ShapeDtypeStruct((N, H, W * Cout), jnp.float32),
        grid=(N,),
        in_specs=[
            pl.BlockSpec((1, Hp, W * Cin), lambda n: (n, 0, 0)),
            pl.BlockSpec(kp["tconv"].shape, lambda n: (0, 0, 0)),
            pl.BlockSpec(kp["aatt"].shape, lambda n: (0, 0)),
            pl.BlockSpec(kp["eexp"].shape, lambda n: (0, 0)),
            pl.BlockSpec(kp["mfuse"].shape, lambda n: (0, 0)),
            pl.BlockSpec(kp["bn_sc"].shape, lambda n: (0, 0)),
            pl.BlockSpec(kp["bn_sh"].shape, lambda n: (0, 0)),
            pl.BlockSpec(kp["alpha"].shape, lambda n: (0, 0)),
        ],
        out_specs=pl.BlockSpec((1, H, W * Cout), lambda n: (n, 0, 0)),
        compiler_params=pltpu.CompilerParams(
            dimension_semantics=("parallel",)),
    )(xp, kp["tconv"], kp["aatt"], kp["eexp"], kp["mfuse"],
      kp["bn_sc"], kp["bn_sh"], kp["alpha"])

    # Unfold lanes -> NHWC -> NCHW.
    return jnp.transpose(out.reshape(N, H, W, Cout), (0, 3, 1, 2))


# ------------------------- pure-JAX reference (NCHW) -------------------------
def reference(x_nchw, wdown, wds, watt, wfuse, bn_scale, bn_shift, alpha):
    dn = ("NCHW", "OIHW", "NCHW")
    hp = jax.lax.Precision.HIGHEST
    conv = functools.partial(lax.conv_general_dilated,
                             dimension_numbers=dn, precision=hp)

    out = conv(x_nchw, wdown, (1, 1), "VALID")
    Ci = out.shape[1]

    def dw(x, w, d):
        return conv(x, w, (1, 1), [(d, d), (d, d)], rhs_dilation=(d, d),
                    feature_group_count=Ci)

    d1 = dw(out, wds[0], 1)
    d2 = dw(out, wds[1], 2)
    d3 = dw(out, wds[2], 4)
    d4 = dw(out, wds[3], 8)

    p = lax.reduce_window(out, 0.0, lax.add, (1, 1, 3, 3), (1, 1, 1, 1),
                          [(0, 0), (0, 0), (1, 1), (1, 1)]) / 9.0

    d1 = d1 + p
    d2 = d1 + d2
    d3 = d2 + d3
    d4 = d3 + d4

    cat = jnp.concatenate([d1, d2, d3, d4], axis=1)
    att = jax.nn.sigmoid(conv(cat, watt, (1, 1), "VALID",
                              feature_group_count=4))
    d1 = d1 + d1 * att[:, 0:1]
    d2 = d2 + d2 * att[:, 1:2]
    d3 = d3 + d3 * att[:, 2:3]
    d4 = d4 + d4 * att[:, 3:4]

    cat = jnp.concatenate([d1, d2, d3, d4], axis=1)
    fused = conv(cat, wfuse, (1, 1), "VALID", feature_group_count=4)

    y = fused * bn_scale[None, :, None, None] + bn_shift[None, :, None, None]
    y = jnp.where(y >= 0, y, y * alpha[None, :, None, None])
    return y


if __name__ == "__main__":
    # module config (small): in_planes=8, out_planes=16 -> inter_planes=4
    N, Cin, H, W = 2, 8, 16, 16
    Cout = 16
    Ci = Cout // 4

    key = jax.random.PRNGKey(0)
    ks = jax.random.split(key, 12)

    x_nchw = jax.random.normal(ks[0], (N, Cin, H, W), jnp.float32)

    # PyTorch-convention (OIHW) weights, deterministic
    wdown = 0.2 * jax.random.normal(ks[1], (Ci, Cin, 1, 1), jnp.float32)
    wds = [0.2 * jax.random.normal(ks[2 + i], (Ci, 1, 3, 3), jnp.float32)
           for i in range(4)]
    watt = 0.2 * jax.random.normal(ks[6], (4, Ci, 1, 1), jnp.float32)
    wfuse = 0.2 * jax.random.normal(ks[7], (Cout, Ci, 1, 1), jnp.float32)

    gamma = 1.0 + 0.1 * jax.random.normal(ks[8], (Cout,), jnp.float32)
    beta = 0.1 * jax.random.normal(ks[9], (Cout,), jnp.float32)
    run_mean = 0.05 * jax.random.normal(ks[10], (Cout,), jnp.float32)
    run_var = 0.5 + jnp.abs(jax.random.normal(ks[11], (Cout,), jnp.float32))
    eps = 1e-5
    bn_scale = gamma / jnp.sqrt(run_var + eps)
    bn_shift = beta - run_mean * bn_scale
    alpha = jnp.full((Cout,), 0.25, jnp.float32)   # PReLU default init

    kp = prepare_params(wdown, wds, watt, wfuse, bn_scale, bn_shift, alpha, W)

    out_nchw = dilated_parallel_conv_block(x_nchw, kp)
    out_nchw = jax.block_until_ready(out_nchw)

    ref_nchw = reference(x_nchw, wdown, wds, watt, wfuse,
                         bn_scale, bn_shift, alpha)

    assert out_nchw.shape == ref_nchw.shape == (N, Cout, H, W)
    max_err = float(jnp.max(jnp.abs(out_nchw - ref_nchw)))
    # Tolerance sized for default-precision (bf16-mantissa) MXU matmuls vs the
    # f32 HIGHEST-precision reference; typical error is ~1e-3.
    assert jnp.allclose(out_nchw, ref_nchw, atol=2e-2, rtol=2e-2), max_err

    print("KERNEL_OK")
</pallas_src>

<mosaic_0001>
module attributes {stable_mosaic.version = 11 : i64} {
  func.func @_dpcb_kernel(%arg0: i32, %arg1: memref<1x32x128xf32, #tpu.memory_space<vmem>>, %arg2: memref<9x128x256xf32, #tpu.memory_space<vmem>>, %arg3: memref<256x64xf32, #tpu.memory_space<vmem>>, %arg4: memref<64x256xf32, #tpu.memory_space<vmem>>, %arg5: memref<256x256xf32, #tpu.memory_space<vmem>>, %arg6: memref<1x256xf32, #tpu.memory_space<vmem>>, %arg7: memref<1x256xf32, #tpu.memory_space<vmem>>, %arg8: memref<1x256xf32, #tpu.memory_space<vmem>>, %arg9: memref<1x16x256xf32, #tpu.memory_space<vmem>>) attributes {dimension_semantics = [#tpu.dimension_semantics<parallel>], iteration_bounds = array<i64: 2>, scalar_prefetch = 0 : i64, scratch_operands = 0 : i64, tpu.core_type = #tpu.core_type<tc>, window_params = [{transform_indices = @transform_0, window_bounds = array<i64: 1, 32, 128>}, {pipeline_mode = #tpu.pipeline_mode<synchronous>, transform_indices = @transform_1, window_bounds = array<i64: 9, 128, 256>}, {pipeline_mode = #tpu.pipeline_mode<synchronous>, transform_indices = @transform_2, window_bounds = array<i64: 256, 64>}, {pipeline_mode = #tpu.pipeline_mode<synchronous>, transform_indices = @transform_3, window_bounds = array<i64: 64, 256>}, {pipeline_mode = #tpu.pipeline_mode<synchronous>, transform_indices = @transform_4, window_bounds = array<i64: 256, 256>}, {pipeline_mode = #tpu.pipeline_mode<synchronous>, transform_indices = @transform_5, window_bounds = array<i64: 1, 256>}, {pipeline_mode = #tpu.pipeline_mode<synchronous>, transform_indices = @transform_6, window_bounds = array<i64: 1, 256>}, {pipeline_mode = #tpu.pipeline_mode<synchronous>, transform_indices = @transform_7, window_bounds = array<i64: 1, 256>}, {transform_indices = @transform_8, window_bounds = array<i64: 1, 16, 256>}]} {
    %c0 = arith.constant 0 : index
    %c0_0 = arith.constant 0 : index
    %c0_1 = arith.constant 0 : index
    %0 = vector.load %arg1[%c0, %c0_0, %c0_1] : memref<1x32x128xf32, #tpu.memory_space<vmem>>, vector<1x32x128xf32>
    %1 = vector.shape_cast %0 : vector<1x32x128xf32> to vector<32x128xf32>
    %cst = arith.constant 0.000000e+00 : f32
    %2 = vector.broadcast %cst : f32 to vector<16x256xf32>
    %3 = vector.extract_strided_slice %1 {offsets = [0, 0], sizes = [16, 128], strides = [1, 1]} : vector<32x128xf32> to vector<16x128xf32>
    %c0_2 = arith.constant 0 : index
    %c0_3 = arith.constant 0 : index
    %c0_4 = arith.constant 0 : index
    %4 = vector.load %arg2[%c0_2, %c0_3, %c0_4] : memref<9x128x256xf32, #tpu.memory_space<vmem>>, vector<1x128x256xf32>
    %5 = vector.shape_cast %4 : vector<1x128x256xf32> to vector<128x256xf32>
    %cst_5 = arith.constant dense<0.000000e+00> : vector<16x256xf32>
    %6 = tpu.matmul %3, %5, %cst_5 {dimension_numbers = #tpu.dot_dimension_numbers<[1], [0], [0], [1], [0, 0, 1, 1], [], []>} : vector<16x128xf32>, vector<128x256xf32>, vector<16x256xf32> -> vector<16x256xf32>
    %7 = arith.addf %2, %6 : vector<16x256xf32>
    %8 = vector.extract_strided_slice %1 {offsets = [4, 0], sizes = [16, 128], strides = [1, 1]} : vector<32x128xf32> to vector<16x128xf32>
    %c1 = arith.constant 1 : index
    %c0_6 = arith.constant 0 : index
    %c0_7 = arith.constant 0 : index
    %9 = vector.load %arg2[%c1, %c0_6, %c0_7] : memref<9x128x256xf32, #tpu.memory_space<vmem>>, vector<1x128x256xf32>
    %10 = vector.shape_cast %9 : vector<1x128x256xf32> to vector<128x256xf32>
    %cst_8 = arith.constant dense<0.000000e+00> : vector<16x256xf32>
    %11 = tpu.matmul %8, %10, %cst_8 {dimension_numbers = #tpu.dot_dimension_numbers<[1], [0], [0], [1], [0, 0, 1, 1], [], []>} : vector<16x128xf32>, vector<128x256xf32>, vector<16x256xf32> -> vector<16x256xf32>
    %12 = arith.addf %7, %11 : vector<16x256xf32>
    %13 = vector.extract_strided_slice %1 {offsets = [6, 0], sizes = [16, 128], strides = [1, 1]} : vector<32x128xf32> to vector<16x128xf32>
    %c2 = arith.constant 2 : index
    %c0_9 = arith.constant 0 : index
    %c0_10 = arith.constant 0 : index
    %14 = vector.load %arg2[%c2, %c0_9, %c0_10] : memref<9x128x256xf32, #tpu.memory_space<vmem>>, vector<1x128x256xf32>
    %15 = vector.shape_cast %14 : vector<1x128x256xf32> to vector<128x256xf32>
    %cst_11 = arith.constant dense<0.000000e+00> : vector<16x256xf32>
    %16 = tpu.matmul %13, %15, %cst_11 {dimension_numbers = #tpu.dot_dimension_numbers<[1], [0], [0], [1], [0, 0, 1, 1], [], []>} : vector<16x128xf32>, vector<128x256xf32>, vector<16x256xf32> -> vector<16x256xf32>
    %17 = arith.addf %12, %16 : vector<16x256xf32>
    %18 = vector.extract_strided_slice %1 {offsets = [7, 0], sizes = [16, 128], strides = [1, 1]} : vector<32x128xf32> to vector<16x128xf32>
    %c3 = arith.constant 3 : index
    %c0_12 = arith.constant 0 : index
    %c0_13 = arith.constant 0 : index
    %19 = vector.load %arg2[%c3, %c0_12, %c0_13] : memref<9x128x256xf32, #tpu.memory_space<vmem>>, vector<1x128x256xf32>
    %20 = vector.shape_cast %19 : vector<1x128x256xf32> to vector<128x256xf32>
    %cst_14 = arith.constant dense<0.000000e+00> : vector<16x256xf32>
    %21 = tpu.matmul %18, %20, %cst_14 {dimension_numbers = #tpu.dot_dimension_numbers<[1], [0], [0], [1], [0, 0, 1, 1], [], []>} : vector<16x128xf32>, vector<128x256xf32>, vector<16x256xf32> -> vector<16x256xf32>
    %22 = arith.addf %17, %21 : vector<16x256xf32>
    %23 = vector.extract_strided_slice %1 {offsets = [8, 0], sizes = [16, 128], strides = [1, 1]} : vector<32x128xf32> to vector<16x128xf32>
    %c4 = arith.constant 4 : index
    %c0_15 = arith.constant 0 : index
    %c0_16 = arith.constant 0 : index
    %24 = vector.load %arg2[%c4, %c0_15, %c0_16] : memref<9x128x256xf32, #tpu.memory_space<vmem>>, vector<1x128x256xf32>
    %25 = vector.shape_cast %24 : vector<1x128x256xf32> to vector<128x256xf32>
    %cst_17 = arith.constant dense<0.000000e+00> : vector<16x256xf32>
    %26 = tpu.matmul %23, %25, %cst_17 {dimension_numbers = #tpu.dot_dimension_numbers<[1], [0], [0], [1], [0, 0, 1, 1], [], []>} : vector<16x128xf32>, vector<128x256xf32>, vector<16x256xf32> -> vector<16x256xf32>
    %27 = arith.addf %22, %26 : vector<16x256xf32>
    %28 = vector.extract_strided_slice %1 {offsets = [9, 0], sizes = [16, 128], strides = [1, 1]} : vector<32x128xf32> to vector<16x128xf32>
    %c5 = arith.constant 5 : index
    %c0_18 = arith.constant 0 : index
    %c0_19 = arith.constant 0 : index
    %29 = vector.load %arg2[%c5, %c0_18, %c0_19] : memref<9x128x256xf32, #tpu.memory_space<vmem>>, vector<1x128x256xf32>
    %30 = vector.shape_cast %29 : vector<1x128x256xf32> to vector<128x256xf32>
    %cst_20 = arith.constant dense<0.000000e+00> : vector<16x256xf32>
    %31 = tpu.matmul %28, %30, %cst_20 {dimension_numbers = #tpu.dot_dimension_numbers<[1], [0], [0], [1], [0, 0, 1, 1], [], []>} : vector<16x128xf32>, vector<128x256xf32>, vector<16x256xf32> -> vector<16x256xf32>
    %32 = arith.addf %27, %31 : vector<16x256xf32>
    %33 = vector.extract_strided_slice %1 {offsets = [10, 0], sizes = [16, 128], strides = [1, 1]} : vector<32x128xf32> to vector<16x128xf32>
    %c6 = arith.constant 6 : index
    %c0_21 = arith.constant 0 : index
    %c0_22 = arith.constant 0 : index
    %34 = vector.load %arg2[%c6, %c0_21, %c0_22] : memref<9x128x256xf32, #tpu.memory_space<vmem>>, vector<1x128x256xf32>
    %35 = vector.shape_cast %34 : vector<1x128x256xf32> to vector<128x256xf32>
    %cst_23 = arith.constant dense<0.000000e+00> : vector<16x256xf32>
    %36 = tpu.matmul %33, %35, %cst_23 {dimension_numbers = #tpu.dot_dimension_numbers<[1], [0], [0], [1], [0, 0, 1, 1], [], []>} : vector<16x128xf32>, vector<128x256xf32>, vector<16x256xf32> -> vector<16x256xf32>
    %37 = arith.addf %32, %36 : vector<16x256xf32>
    %38 = vector.extract_strided_slice %1 {offsets = [12, 0], sizes = [16, 128], strides = [1, 1]} : vector<32x128xf32> to vector<16x128xf32>
    %c7 = arith.constant 7 : index
    %c0_24 = arith.constant 0 : index
    %c0_25 = arith.constant 0 : index
    %39 = vector.load %arg2[%c7, %c0_24, %c0_25] : memref<9x128x256xf32, #tpu.memory_space<vmem>>, vector<1x128x256xf32>
    %40 = vector.shape_cast %39 : vector<1x128x256xf32> to vector<128x256xf32>
    %cst_26 = arith.constant dense<0.000000e+00> : vector<16x256xf32>
    %41 = tpu.matmul %38, %40, %cst_26 {dimension_numbers = #tpu.dot_dimension_numbers<[1], [0], [0], [1], [0, 0, 1, 1], [], []>} : vector<16x128xf32>, vector<128x256xf32>, vector<16x256xf32> -> vector<16x256xf32>
    %42 = arith.addf %37, %41 : vector<16x256xf32>
    %43 = vector.extract_strided_slice %1 {offsets = [16, 0], sizes = [16, 128], strides = [1, 1]} : vector<32x128xf32> to vector<16x128xf32>
    %c8 = arith.constant 8 : index
    %c0_27 = arith.constant 0 : index
    %c0_28 = arith.constant 0 : index
    %44 = vector.load %arg2[%c8, %c0_27, %c0_28] : memref<9x128x256xf32, #tpu.memory_space<vmem>>, vector<1x128x256xf32>
    %45 = vector.shape_cast %44 : vector<1x128x256xf32> to vector<128x256xf32>
    %cst_29 = arith.constant dense<0.000000e+00> : vector<16x256xf32>
    %46 = tpu.matmul %43, %45, %cst_29 {dimension_numbers = #tpu.dot_dimension_numbers<[1], [0], [0], [1], [0, 0, 1, 1], [], []>} : vector<16x128xf32>, vector<128x256xf32>, vector<16x256xf32> -> vector<16x256xf32>
    %47 = arith.addf %42, %46 : vector<16x256xf32>
    %c0_30 = arith.constant 0 : index
    %c0_31 = arith.constant 0 : index
    %48 = vector.load %arg3[%c0_30, %c0_31] : memref<256x64xf32, #tpu.memory_space<vmem>>, vector<256x64xf32>
    %cst_32 = arith.constant dense<0.000000e+00> : vector<16x64xf32>
    %49 = tpu.matmul %47, %48, %cst_32 {dimension_numbers = #tpu.dot_dimension_numbers<[1], [0], [0], [1], [0, 0, 1, 1], [], []>} : vector<16x256xf32>, vector<256x64xf32>, vector<16x64xf32> -> vector<16x64xf32>
    %50 = arith.negf %49 : vector<16x64xf32>
    %51 = math.exp %50 : vector<16x64xf32>
    %cst_33 = arith.constant 1.000000e+00 : f32
    %52 = vector.broadcast %cst_33 : f32 to vector<16x64xf32>
    %53 = arith.addf %52, %51 : vector<16x64xf32>
    %54 = arith.divf %52, %53 : vector<16x64xf32>
    %c0_34 = arith.constant 0 : index
    %c0_35 = arith.constant 0 : index
    %55 = vector.load %arg4[%c0_34, %c0_35] : memref<64x256xf32, #tpu.memory_space<vmem>>, vector<64x256xf32>
    %cst_36 = arith.constant dense<0.000000e+00> : vector<16x256xf32>
    %56 = tpu.matmul %54, %55, %cst_36 {dimension_numbers = #tpu.dot_dimension_numbers<[1], [0], [0], [1], [0, 0, 1, 1], [], []>} : vector<16x64xf32>, vector<64x256xf32>, vector<16x256xf32> -> vector<16x256xf32>
    %cst_37 = arith.constant 1.000000e+00 : f32
    %57 = vector.broadcast %cst_37 : f32 to vector<16x256xf32>
    %58 = arith.addf %57, %56 : vector<16x256xf32>
    %59 = arith.mulf %47, %58 : vector<16x256xf32>
    %c0_38 = arith.constant 0 : index
    %c0_39 = arith.constant 0 : index
    %60 = vector.load %arg5[%c0_38, %c0_39] : memref<256x256xf32, #tpu.memory_space<vmem>>, vector<256x256xf32>
    %cst_40 = arith.constant dense<0.000000e+00> : vector<16x256xf32>
    %61 = tpu.matmul %59, %60, %cst_40 {dimension_numbers = #tpu.dot_dimension_numbers<[1], [0], [0], [1], [0, 0, 1, 1], [], []>} : vector<16x256xf32>, vector<256x256xf32>, vector<16x256xf32> -> vector<16x256xf32>
    %c0_41 = arith.constant 0 : index
    %c0_42 = arith.constant 0 : index
    %62 = vector.load %arg6[%c0_41, %c0_42] : memref<1x256xf32, #tpu.memory_space<vmem>>, vector<1x256xf32>
    %63 = vector.shape_cast %62 : vector<1x256xf32> to vector<256xf32>
    %64 = vector.shape_cast %63 : vector<256xf32> to vector<1x256xf32>
    %65 = vector.broadcast %64 : vector<1x256xf32> to vector<16x256xf32>
    %66 = arith.mulf %61, %65 : vector<16x256xf32>
    %c0_43 = arith.constant 0 : index
    %c0_44 = arith.constant 0 : index
    %67 = vector.load %arg7[%c0_43, %c0_44] : memref<1x256xf32, #tpu.memory_space<vmem>>, vector<1x256xf32>
    %68 = vector.shape_cast %67 : vector<1x256xf32> to vector<256xf32>
    %69 = vector.shape_cast %68 : vector<256xf32> to vector<1x256xf32>
    %70 = vector.broadcast %69 : vector<1x256xf32> to vector<16x256xf32>
    %71 = arith.addf %66, %70 : vector<16x256xf32>
    %cst_45 = arith.constant 0.000000e+00 : f32
    %72 = vector.broadcast %cst_45 : f32 to vector<16x256xf32>
    %73 = arith.cmpf oge, %71, %72 : vector<16x256xf32>
    %c0_46 = arith.constant 0 : index
    %c0_47 = arith.constant 0 : index
    %74 = vector.load %arg8[%c0_46, %c0_47] : memref<1x256xf32, #tpu.memory_space<vmem>>, vector<1x256xf32>
    %75 = vector.shape_cast %74 : vector<1x256xf32> to vector<256xf32>
    %76 = vector.shape_cast %75 : vector<256xf32> to vector<1x256xf32>
    %77 = vector.broadcast %76 : vector<1x256xf32> to vector<16x256xf32>
    %78 = arith.mulf %71, %77 : vector<16x256xf32>
    %79 = arith.select %73, %71, %78 : vector<16x256xi1>, vector<16x256xf32>
    %c0_48 = arith.constant 0 : index
    %c0_49 = arith.constant 0 : index
    %c0_50 = arith.constant 0 : index
    %80 = vector.load %arg9[%c0_48, %c0_49, %c0_50] : memref<1x16x256xf32, #tpu.memory_space<vmem>>, vector<1x16x256xf32>
    %81 = vector.shape_cast %80 : vector<1x16x256xf32> to vector<16x256xf32>
    %82 = vector.shape_cast %79 : vector<16x256xf32> to vector<1x16x256xf32>
    tpu.vector_store %arg9[%c0_48, %c0_49, %c0_50], %82 {strides = array<i32>} : memref<1x16x256xf32, #tpu.memory_space<vmem>>, vector<1x16x256xf32>,
    return
  }
  func.func @transform_0(%arg0: i32) -> (i32, i32, i32) {
    %c0_i32 = arith.constant 0 : i32
    %c0_i32_0 = arith.constant 0 : i32
    %c0_i32_1 = arith.constant 0 : i32
    return %arg0, %c0_i32, %c0_i32_0 : i32, i32, i32
  }
  func.func @transform_1(%arg0: i32) -> (i32, i32, i32) {
    %c0_i32 = arith.constant 0 : i32
    %c0_i32_0 = arith.constant 0 : i32
    %c0_i32_1 = arith.constant 0 : i32
    %c0_i32_2 = arith.constant 0 : i32
    return %c0_i32, %c0_i32_0, %c0_i32_1 : i32, i32, i32
  }
  func.func @transform_2(%arg0: i32) -> (i32, i32) {
    %c0_i32 = arith.constant 0 : i32
    %c0_i32_0 = arith.constant 0 : i32
    %c0_i32_1 = arith.constant 0 : i32
    return %c0_i32, %c0_i32_0 : i32, i32
  }
  func.func @transform_3(%arg0: i32) -> (i32, i32) {
    %c0_i32 = arith.constant 0 : i32
    %c0_i32_0 = arith.constant 0 : i32
    %c0_i32_1 = arith.constant 0 : i32
    return %c0_i32, %c0_i32_0 : i32, i32
  }
  func.func @transform_4(%arg0: i32) -> (i32, i32) {
    %c0_i32 = arith.constant 0 : i32
    %c0_i32_0 = arith.constant 0 : i32
    %c0_i32_1 = arith.constant 0 : i32
    return %c0_i32, %c0_i32_0 : i32, i32
  }
  func.func @transform_5(%arg0: i32) -> (i32, i32) {
    %c0_i32 = arith.constant 0 : i32
    %c0_i32_0 = arith.constant 0 : i32
    %c0_i32_1 = arith.constant 0 : i32
    return %c0_i32, %c0_i32_0 : i32, i32
  }
  func.func @transform_6(%arg0: i32) -> (i32, i32) {
    %c0_i32 = arith.constant 0 : i32
    %c0_i32_0 = arith.constant 0 : i32
    %c0_i32_1 = arith.constant 0 : i32
    return %c0_i32, %c0_i32_0 : i32, i32
  }
  func.func @transform_7(%arg0: i32) -> (i32, i32) {
    %c0_i32 = arith.constant 0 : i32
    %c0_i32_0 = arith.constant 0 : i32
    %c0_i32_1 = arith.constant 0 : i32
    return %c0_i32, %c0_i32_0 : i32, i32
  }
  func.func @transform_8(%arg0: i32) -> (i32, i32, i32) {
    %c0_i32 = arith.constant 0 : i32
    %c0_i32_0 = arith.constant 0 : i32
    %c0_i32_1 = arith.constant 0 : i32
    return %arg0, %c0_i32, %c0_i32_0 : i32, i32, i32
  }
}

</mosaic_0001>

<llo_original>
// kernel: tpu_custom_call.1
$region0: #{tpu_custom_call.1}
  #allocation0 [shape = 'u32[]', space=smem, size = 0x4, offset = 0x4, fixed_abs, tag = 'smem constant byte address 0x4 - core index']
  #allocation1 [shape = 'u32[144,128]{1,0:T(1,128)}', space=vmem, size = 0x12000, scoped, tag = 'internal scratch']
  %s0 = inlined_call_operand.hbm [shape: f32[2,32,128], index: 0, kind: input, shape index: {}]
  %s1 = inlined_call_operand.hbm [shape: f32[9,128,256], index: 1, kind: input, shape index: {}]
  %s2 = inlined_call_operand.vmem [shape: f32[256,64], index: 2, kind: input, shape index: {}]
  %s3 = inlined_call_operand.hbm [shape: f32[64,256], index: 3, kind: input, shape index: {}]
  %s4 = inlined_call_operand.hbm [shape: f32[256,256], index: 4, kind: input, shape index: {}]
  %s5 = inlined_call_operand.hbm [shape: f32[1,256], index: 5, kind: input, shape index: {}]
  %s6 = inlined_call_operand.hbm [shape: f32[1,256], index: 6, kind: input, shape index: {}]
  %s7 = inlined_call_operand.hbm [shape: f32[1,256], index: 7, kind: input, shape index: {}]
  %s8 = inlined_call_operand.hbm [shape: f32[2,16,256], index: 8, kind: output, shape index: {}]
  %s9 = sld [smem:[#allocation0]]
  $region93: #{tpu_custom_call.1} parent=0
    _
  %s11 = ssub.s32 1, %s9
  %s12 = scalar_select 0, %s11, %s9
  $region1: #{tpu_custom_call.1} parent=0
    #allocation2 [shape = 'u8[32768]{0}', space=vmem, size = 0x8000, scoped, tag = 'input window, operand 0']
    #allocation3 [shape = 's32[2]{0}', space=sflag, size = 0x8, scoped, tag = 'scoped memory for tpu_custom_call.1']
    #allocation4 [shape = 's32[2]{0}', space=sflag, size = 0x8, scoped, tag = 'scoped memory for tpu_custom_call.1']
    #allocation5 [shape = 'u8[1179648]{0}', space=vmem, size = 0x120000, scoped, tag = 'input window, operand 1, single buffered']
    #allocation6 [shape = 's32[1]{0}', space=sflag, size = 0x4, scoped, tag = 'scoped memory for tpu_custom_call.1']
    #allocation7 [shape = 'u8[65536]{0}', space=vmem, size = 0x10000, scoped, tag = 'input window, operand 3, single buffered']
    #allocation8 [shape = 'u8[262144]{0}', space=vmem, size = 0x40000, scoped, tag = 'input window, operand 4, single buffered']
    #allocation9 [shape = 's32[1]{0}', space=sflag, size = 0x4, scoped, tag = 'scoped memory for tpu_custom_call.1']
    #allocation10 [shape = 'u8[1024]{0}', space=vmem, size = 0x400, scoped, tag = 'input window, operand 5, single buffered']
    #allocation11 [shape = 'u8[1024]{0}', space=vmem, size = 0x400, scoped, tag = 'input window, operand 6, single buffered']
    #allocation12 [shape = 's32[1]{0}', space=sflag, size = 0x4, scoped, tag = 'scoped memory for tpu_custom_call.1']
    #allocation13 [shape = 'u8[1024]{0}', space=vmem, size = 0x400, scoped, tag = 'input window, operand 7, single buffered']
    #allocation14 [shape = 'u8[32768]{0}', space=vmem, size = 0x8000, scoped, tag = 'output window, operand 0']
    %13 = vsyncpa [#allocation3], 0
    %s14 = scalar_lea.sflag [#allocation3], 1
    %15 = vsyncpa %s14, 0
    %16 = vsyncpa [#allocation6], 0
    %17 = vsyncpa [#allocation9], 0
    %18 = vsyncpa [#allocation12], 0
    %19 = vsyncpa [#allocation4], 0
    %s20 = scalar_lea.sflag [#allocation4], 1
    %21 = vsyncpa %s20, 0
    loop: start=0, step=1, limit=4
    $region2: #{tpu_custom_call.1} parent=1 // loop_pre_header
      _
    $region3: #{tpu_custom_call.1} parent=1 // loop_header
      %s23 = sphi 0, %s27
      %p24 = scmp.ge.s32.totalorder %s23, 4
      %s33 = sphi 0, %s35
      %s36 = sphi 0, %s33
      %s37 = sphi 0, %s36
      %s53 = sphi 0, %s37
      %s57 = sphi 0, %s57
      %s59 = sphi 0, %s57
      %s60 = sphi 0, %s59
      %s74 = sphi 0, %s60
      %s78 = sphi 0, %s78
      %s80 = sphi 0, %s78
      %s81 = sphi 0, %s80
      %s95 = sphi 0, %s81
      %s99 = sphi 0, %s99
      %s101 = sphi 0, %s99
      %s102 = sphi 0, %s101
      %s116 = sphi 0, %s102
      %s120 = sphi 0, %s120
      %s122 = sphi 0, %s120
      %s123 = sphi 0, %s122
      %s137 = sphi 0, %s123
      %s141 = sphi 0, %s141
      %s143 = sphi 0, %s141
      %s144 = sphi 0, %s143
      %s158 = sphi 0, %s144
      %s162 = sphi 0, %s162
      %s164 = sphi 0, %s162
      %s165 = sphi 0, %s164
      %s179 = sphi 0, %s165
      %s183 = sphi 0, %s183
      %s185 = sphi 0, %s183
      %s186 = sphi 0, %s185
      %s200 = sphi 0, %s186
      %s206 = sphi 0, %s208
      %s209 = sphi 0, %s206
      %s210 = sphi 0, %s209
      %s226 = sphi 0, %s210
    $region4: #{tpu_custom_call.1} parent=1 // loop_header_branch
      %26 = sbr.rel (%p24) target = $region8
    $region5: #{tpu_custom_call.1} parent=1 // loop_body
      %s28 = ssub.s32 %s23, 1
      %s29 = ssub.s32 %s23, 2
      %s30 = sadd.s32 %s23, 1
      %s31 = ssub.s32 %s23, %s30
      %p32 = scmp.eq.s32.totalorder %s31, 0
      %s34 = sadd.s32 %s33, 1
      %s35 = scalar_select %p32, %s33, %s34
      %p38 = pneg %p32
      %p39 = scmp.eq.s32.totalorder %s23, 1
      %p40 = por %p38, %p39
      %p41 = scmp.ne.s32.totalorder %s33, %s36
      %p42 = scmp.eq.s32.totalorder %s23, 0
      %p43 = por %p41, %p42
      %p44 = scmp.ne.s32.totalorder %s33, %s36
      %p45 = scmp.eq.s32.totalorder %s28, 1
      %p46 = por %p44, %p45
      %p47 = scmp.ne.s32.totalorder %s36, %s37
      %p48 = scmp.eq.s32.totalorder %s28, 0
      %p49 = por %p47, %p48
      %p50 = scmp.ne.s32.totalorder %s36, %s37
      %p51 = scmp.eq.s32.totalorder %s29, 1
      %p52 = por %p50, %p51
      %p54 = scmp.ne.s32.totalorder %s37, %s53
      %p55 = scmp.eq.s32.totalorder %s29, 0
      %p56 = por %p54, %p55
      %s58 = sadd.s32 %s57, 1
      %p61 = scmp.eq.s32.totalorder %s23, 1
      %p62 = scmp.ne.s32.totalorder %s57, %s59
      %p63 = scmp.eq.s32.totalorder %s23, 0
      %p64 = por %p62, %p63
      %p65 = scmp.ne.s32.totalorder %s57, %s59
      %p66 = scmp.eq.s32.totalorder %s28, 1
      %p67 = por %p65, %p66
      %p68 = scmp.ne.s32.totalorder %s59, %s60
      %p69 = scmp.eq.s32.totalorder %s28, 0
      %p70 = por %p68, %p69
      %p71 = scmp.ne.s32.totalorder %s59, %s60
      %p72 = scmp.eq.s32.totalorder %s29, 1
      %p73 = por %p71, %p72
      %p75 = scmp.ne.s32.totalorder %s60, %s74
      %p76 = scmp.eq.s32.totalorder %s29, 0
      %p77 = por %p75, %p76
      %s79 = sadd.s32 %s78, 1
      %p82 = scmp.eq.s32.totalorder %s23, 1
      %p83 = scmp.ne.s32.totalorder %s78, %s80
      %p84 = scmp.eq.s32.totalorder %s23, 0
      %p85 = por %p83, %p84
      %p86 = scmp.ne.s32.totalorder %s78, %s80
      %p87 = scmp.eq.s32.totalorder %s28, 1
      %p88 = por %p86, %p87
      %p89 = scmp.ne.s32.totalorder %s80, %s81
      %p90 = scmp.eq.s32.totalorder %s28, 0
      %p91 = por %p89, %p90
      %p92 = scmp.ne.s32.totalorder %s80, %s81
      %p93 = scmp.eq.s32.totalorder %s29, 1
      %p94 = por %p92, %p93
      %p96 = scmp.ne.s32.totalorder %s81, %s95
      %p97 = scmp.eq.s32.totalorder %s29, 0
      %p98 = por %p96, %p97
      %s100 = sadd.s32 %s99, 1
      %p103 = scmp.eq.s32.totalorder %s23, 1
      %p104 = scmp.ne.s32.totalorder %s99, %s101
      %p105 = scmp.eq.s32.totalorder %s23, 0
      %p106 = por %p104, %p105
      %p107 = scmp.ne.s32.totalorder %s99, %s101
      %p108 = scmp.eq.s32.totalorder %s28, 1
      %p109 = por %p107, %p108
      %p110 = scmp.ne.s32.totalorder %s101, %s102
      %p111 = scmp.eq.s32.totalorder %s28, 0
      %p112 = por %p110, %p111
      %p113 = scmp.ne.s32.totalorder %s101, %s102
      %p114 = scmp.eq.s32.totalorder %s29, 1
      %p115 = por %p113, %p114
      %p117 = scmp.ne.s32.totalorder %s102, %s116
      %p118 = scmp.eq.s32.totalorder %s29, 0
      %p119 = por %p117, %p118
      %s121 = sadd.s32 %s120, 1
      %p124 = scmp.eq.s32.totalorder %s23, 1
      %p125 = scmp.ne.s32.totalorder %s120, %s122
      %p126 = scmp.eq.s32.totalorder %s23, 0
      %p127 = por %p125, %p126
      %p128 = scmp.ne.s32.totalorder %s120, %s122
      %p129 = scmp.eq.s32.totalorder %s28, 1
      %p130 = por %p128, %p129
      %p131 = scmp.ne.s32.totalorder %s122, %s123
      %p132 = scmp.eq.s32.totalorder %s28, 0
      %p133 = por %p131, %p132
      %p134 = scmp.ne.s32.totalorder %s122, %s123
      %p135 = scmp.eq.s32.totalorder %s29, 1
      %p136 = por %p134, %p135
      %p138 = scmp.ne.s32.totalorder %s123, %s137
      %p139 = scmp.eq.s32.totalorder %s29, 0
      %p140 = por %p138, %p139
      %s142 = sadd.s32 %s141, 1
      %p145 = scmp.eq.s32.totalorder %s23, 1
      %p146 = scmp.ne.s32.totalorder %s141, %s143
      %p147 = scmp.eq.s32.totalorder %s23, 0
      %p148 = por %p146, %p147
      %p149 = scmp.ne.s32.totalorder %s141, %s143
      %p150 = scmp.eq.s32.totalorder %s28, 1
      %p151 = por %p149, %p150
      %p152 = scmp.ne.s32.totalorder %s143, %s144
      %p153 = scmp.eq.s32.totalorder %s28, 0
      %p154 = por %p152, %p153
      %p155 = scmp.ne.s32.totalorder %s143, %s144
      %p156 = scmp.eq.s32.totalorder %s29, 1
      %p157 = por %p155, %p156
      %p159 = scmp.ne.s32.totalorder %s144, %s158
      %p160 = scmp.eq.s32.totalorder %s29, 0
      %p161 = por %p159, %p160
      %s163 = sadd.s32 %s162, 1
      %p166 = scmp.eq.s32.totalorder %s23, 1
      %p167 = scmp.ne.s32.totalorder %s162, %s164
      %p168 = scmp.eq.s32.totalorder %s23, 0
      %p169 = por %p167, %p168
      %p170 = scmp.ne.s32.totalorder %s162, %s164
      %p171 = scmp.eq.s32.totalorder %s28, 1
      %p172 = por %p170, %p171
      %p173 = scmp.ne.s32.totalorder %s164, %s165
      %p174 = scmp.eq.s32.totalorder %s28, 0
      %p175 = por %p173, %p174
      %p176 = scmp.ne.s32.totalorder %s164, %s165
      %p177 = scmp.eq.s32.totalorder %s29, 1
      %p178 = por %p176, %p177
      %p180 = scmp.ne.s32.totalorder %s165, %s179
      %p181 = scmp.eq.s32.totalorder %s29, 0
      %p182 = por %p180, %p181
      %s184 = sadd.s32 %s183, 1
      %p187 = scmp.eq.s32.totalorder %s23, 1
      %p188 = scmp.ne.s32.totalorder %s183, %s185
      %p189 = scmp.eq.s32.totalorder %s23, 0
      %p190 = por %p188, %p189
      %p191 = scmp.ne.s32.totalorder %s183, %s185
      %p192 = scmp.eq.s32.totalorder %s28, 1
      %p193 = por %p191, %p192
      %p194 = scmp.ne.s32.totalorder %s185, %s186
      %p195 = scmp.eq.s32.totalorder %s28, 0
      %p196 = por %p194, %p195
      %p197 = scmp.ne.s32.totalorder %s185, %s186
      %p198 = scmp.eq.s32.totalorder %s29, 1
      %p199 = por %p197, %p198
      %p201 = scmp.ne.s32.totalorder %s186, %s200
      %p202 = scmp.eq.s32.totalorder %s29, 0
      %p203 = por %p201, %p202
      %s204 = ssub.s32 %s23, %s30
      %p205 = scmp.eq.s32.totalorder %s204, 0
      %s207 = sadd.s32 %s206, 1
      %s208 = scalar_select %p205, %s206, %s207
      %p211 = pneg %p205
      %p212 = scmp.eq.s32.totalorder %s23, 1
      %p213 = por %p211, %p212
      %p214 = scmp.ne.s32.totalorder %s206, %s209
      %p215 = scmp.eq.s32.totalorder %s23, 0
      %p216 = por %p214, %p215
      %p217 = scmp.ne.s32.totalorder %s206, %s209
      %p218 = scmp.eq.s32.totalorder %s28, 1
      %p219 = por %p217, %p218
      %p220 = scmp.ne.s32.totalorder %s209, %s210
      %p221 = scmp.eq.s32.totalorder %s28, 0
      %p222 = por %p220, %p221
      %p223 = scmp.ne.s32.totalorder %s209, %s210
      %p224 = scmp.eq.s32.totalorder %s29, 1
      %p225 = por %p223, %p224
      %p227 = scmp.ne.s32.totalorder %s210, %s226
      %p228 = scmp.eq.s32.totalorder %s29, 0
      %p229 = por %p227, %p228
      %p230 = scmp.le.s32.totalorder 1, %s23
      %p231 = scmp.lt.s32.totalorder %s23, 3
      %p232 = pnand %p230, %p231
      %p233 = pneg %p232
      // Predicated region
      $region9: #{tpu_custom_call.1} parent=5 // pred_check
        _
      $region10: #{tpu_custom_call.1} parent=5 // pred_check_branch
        %235 = sbr.rel (%p232) target = $region12
      $region11: #{tpu_custom_call.1} parent=5 // pred_region
        %s236 = ssub.s32 %s23, 1
        // Predicated region
        $region13: #{tpu_custom_call.1} parent=11 // pred_check
          %p237 = pneg %p70
        $region14: #{tpu_custom_call.1} parent=11 // pred_check_branch
          %239 = sbr.rel (%p237) target = $region16
        $region15: #{tpu_custom_call.1} parent=11 // pred_region
          %s241 = ssub.s32 36864, 36864
          %242 = vsyncadd [#allocation6], %s241
          %s243 = sshll.u32 [#allocation5], 4
          %s244 = int_to_ptr.vmem [resolvable:$true] %s243
          %249 = dma.hbm_to_vmem [thread:$0]  %s1, 36864, %s244, [#allocation6], 256, 256, 16
        $region16: #{tpu_custom_call.1} parent=11 // pred_fallthru
          _
        // Predicated region
        $region17: #{tpu_custom_call.1} parent=11 // pred_check
          %p250 = pneg %p91
        $region18: #{tpu_custom_call.1} parent=11 // pred_check_branch
          %252 = sbr.rel (%p250) target = $region20
        $region19: #{tpu_custom_call.1} parent=11 // pred_region
          _
        $region20: #{tpu_custom_call.1} parent=11 // pred_fallthru
          _
        // Predicated region
        $region21: #{tpu_custom_call.1} parent=11 // pred_check
          %p253 = pneg %p112
        $region22: #{tpu_custom_call.1} parent=11 // pred_check_branch
          %255 = sbr.rel (%p253) target = $region24
        $region23: #{tpu_custom_call.1} parent=11 // pred_region
          %s257 = ssub.s32 2048, 2048
          %258 = vsyncadd [#allocation6], %s257
          %s259 = sshll.u32 [#allocation7], 4
          %s260 = int_to_ptr.vmem [resolvable:$true] %s259
          %265 = dma.hbm_to_vmem [thread:$0]  %s3, 2048, %s260, [#allocation6], 256, 256, 16
        $region24: #{tpu_custom_call.1} parent=11 // pred_fallthru
          _
        // Predicated region
        $region25: #{tpu_custom_call.1} parent=11 // pred_check
          %p266 = pneg %p133
        $region26: #{tpu_custom_call.1} parent=11 // pred_check_branch
          %268 = sbr.rel (%p266) target = $region28
        $region27: #{tpu_custom_call.1} parent=11 // pred_region
          %s270 = ssub.s32 8192, 8192
          %271 = vsyncadd [#allocation9], %s270
          %s272 = sshll.u32 [#allocation8], 4
          %s273 = int_to_ptr.vmem [resolvable:$true] %s272
          %278 = dma.hbm_to_vmem [thread:$0]  %s4, 8192, %s273, [#allocation9], 256, 256, 16
        $region28: #{tpu_custom_call.1} parent=11 // pred_fallthru
          _
        // Predicated region
        $region29: #{tpu_custom_call.1} parent=11 // pred_check
          %p279 = pneg %p154
        $region30: #{tpu_custom_call.1} parent=11 // pred_check_branch
          %281 = sbr.rel (%p279) target = $region32
        $region31: #{tpu_custom_call.1} parent=11 // pred_region
          %s283 = ssub.s32 32, 32
          %284 = vsyncadd [#allocation9], %s283
          %s286 = sshll.u32 [#allocation10], 4
          %s287 = int_to_ptr.vmem [resolvable:$true] %s286
          %289 = dma.hbm_to_vmem [thread:$0]  %s5, 32, %s287, [#allocation9]
        $region32: #{tpu_custom_call.1} parent=11 // pred_fallthru
          _
        // Predicated region
        $region33: #{tpu_custom_call.1} parent=11 // pred_check
          %p290 = pneg %p175
        $region34: #{tpu_custom_call.1} parent=11 // pred_check_branch
          %292 = sbr.rel (%p290) target = $region36
        $region35: #{tpu_custom_call.1} parent=11 // pred_region
          %s294 = ssub.s32 32, 32
          %295 = vsyncadd [#allocation12], %s294
          %s297 = sshll.u32 [#allocation11], 4
          %s298 = int_to_ptr.vmem [resolvable:$true] %s297
          %300 = dma.hbm_to_vmem [thread:$0]  %s6, 32, %s298, [#allocation12]
        $region36: #{tpu_custom_call.1} parent=11 // pred_fallthru
          _
        // Predicated region
        $region37: #{tpu_custom_call.1} parent=11 // pred_check
          %p301 = pneg %p196
        $region38: #{tpu_custom_call.1} parent=11 // pred_check_branch
          %303 = sbr.rel (%p301) target = $region40
        $region39: #{tpu_custom_call.1} parent=11 // pred_region
          %s305 = ssub.s32 32, 32
          %306 = vsyncadd [#allocation12], %s305
          %s308 = sshll.u32 [#allocation13], 4
          %s309 = int_to_ptr.vmem [resolvable:$true] %s308
          %311 = dma.hbm_to_vmem [thread:$0]  %s7, 32, %s309, [#allocation12]
        $region40: #{tpu_custom_call.1} parent=11 // pred_fallthru
          _
      $region12: #{tpu_custom_call.1} parent=5 // pred_fallthru
        _
      %p312 = scmp.lt.s32.totalorder %s23, 2
      // Predicated region
      $region41: #{tpu_custom_call.1} parent=5 // pred_check
        %p313 = pneg %p312
      $region42: #{tpu_custom_call.1} parent=5 // pred_check_branch
        %315 = sbr.rel (%p313) target = $region44
      $region43: #{tpu_custom_call.1} parent=5 // pred_region
        // Predicated region
        $region45: #{tpu_custom_call.1} parent=43 // pred_check
          %p316 = pneg %p43
        $region46: #{tpu_custom_call.1} parent=43 // pred_check_branch
          %318 = sbr.rel (%p316) target = $region48
        $region47: #{tpu_custom_call.1} parent=43 // pred_region
          %s319 = sand.u32 %s33, 1
          %s320 = scalar_lea.sflag [#allocation3], %s319
          %s321 = sand.u32 %s33, 1
          %s322 = smul.addr %s321, 32
          %s323 = scalar_lea.vmem [#allocation2], %s322
          %s325 = ssub.s32 512, 512
          %326 = vsyncadd %s320, %s325
          %s327 = smul.addr %s23, 4
          %s328 = smul.addr %s327, 128
          %s329 = scalar_lea.hbm %s0, %s328
          %s330 = sshll.u32 %s323, 4
          %s331 = int_to_ptr.vmem [resolvable:$true] %s330
          %336 = dma.hbm_to_vmem [thread:$0]  %s329, 512, %s331, %s320, 128, 128, 8
        $region48: #{tpu_custom_call.1} parent=43 // pred_fallthru
          _
      $region44: #{tpu_custom_call.1} parent=5 // pred_fallthru
        _
      %p337 = scmp.le.s32.totalorder 1, %s23
      %p338 = scmp.lt.s32.totalorder %s23, 3
      %p339 = pnand %p337, %p338
      %p340 = pneg %p339
      // Predicated region
      $region49: #{tpu_custom_call.1} parent=5 // pred_check
        _
      $region50: #{tpu_custom_call.1} parent=5 // pred_check_branch
        %342 = sbr.rel (%p339) target = $region52
      $region51: #{tpu_custom_call.1} parent=5 // pred_region
        %s343 = ssub.s32 %s23, 1
        %s344 = sand.u32 %s36, 1
        %s345 = scalar_lea.sflag [#allocation3], %s344
        %s346 = sand.u32 %s36, 1
        %s347 = smul.addr %s346, 32
        %s348 = scalar_lea.vmem [#allocation2], %s347
        // Predicated region
        $region53: #{tpu_custom_call.1} parent=51 // pred_check
          %p349 = pneg %p49
        $region54: #{tpu_custom_call.1} parent=51 // pred_check_branch
          %351 = sbr.rel (%p349) target = $region56
        $region55: #{tpu_custom_call.1} parent=51 // pred_region
          %352 = dma.done %s345, 512
        $region56: #{tpu_custom_call.1} parent=51 // pred_fallthru
          _
        // Predicated region
        $region57: #{tpu_custom_call.1} parent=51 // pred_check
          %p353 = pneg %p70
        $region58: #{tpu_custom_call.1} parent=51 // pred_check_branch
          %355 = sbr.rel (%p353) target = $region60
        $region59: #{tpu_custom_call.1} parent=51 // pred_region
          %356 = dma.done [#allocation6], 36864
        $region60: #{tpu_custom_call.1} parent=51 // pred_fallthru
          _
        // Predicated region
        $region61: #{tpu_custom_call.1} parent=51 // pred_check
          %p357 = pneg %p112
        $region62: #{tpu_custom_call.1} parent=51 // pred_check_branch
          %359 = sbr.rel (%p357) target = $region64
        $region63: #{tpu_custom_call.1} parent=51 // pred_region
          %360 = dma.done [#allocation6], 2048
        $region64: #{tpu_custom_call.1} parent=51 // pred_fallthru
          _
        // Predicated region
        $region65: #{tpu_custom_call.1} parent=51 // pred_check
          %p361 = pneg %p133
        $region66: #{tpu_custom_call.1} parent=51 // pred_check_branch
          %363 = sbr.rel (%p361) target = $region68
        $region67: #{tpu_custom_call.1} parent=51 // pred_region
          %364 = dma.done [#allocation9], 8192
        $region68: #{tpu_custom_call.1} parent=51 // pred_fallthru
          _
        // Predicated region
        $region69: #{tpu_custom_call.1} parent=51 // pred_check
          %p365 = pneg %p154
        $region70: #{tpu_custom_call.1} parent=51 // pred_check_branch
          %367 = sbr.rel (%p365) target = $region72
        $region71: #{tpu_custom_call.1} parent=51 // pred_region
          %368 = dma.done [#allocation9], 32
        $region72: #{tpu_custom_call.1} parent=51 // pred_fallthru
          _
        // Predicated region
        $region73: #{tpu_custom_call.1} parent=51 // pred_check
          %p369 = pneg %p175
        $region74: #{tpu_custom_call.1} parent=51 // pred_check_branch
          %371 = sbr.rel (%p369) target = $region76
        $region75: #{tpu_custom_call.1} parent=51 // pred_region
          %372 = dma.done [#allocation12], 32
        $region76: #{tpu_custom_call.1} parent=51 // pred_fallthru
          _
        // Predicated region
        $region77: #{tpu_custom_call.1} parent=51 // pred_check
          %p373 = pneg %p196
        $region78: #{tpu_custom_call.1} parent=51 // pred_check_branch
          %375 = sbr.rel (%p373) target = $region80
        $region79: #{tpu_custom_call.1} parent=51 // pred_region
          %376 = dma.done [#allocation12], 32
        $region80: #{tpu_custom_call.1} parent=51 // pred_fallthru
          _
        %s377 = sand.u32 %s36, 1
        %s378 = scalar_lea.sflag [#allocation3], %s377
        %s379 = sand.u32 %s36, 1
        %s380 = smul.addr %s379, 32
        %s381 = scalar_lea.vmem [#allocation2], %s380
        %p382 = pneg %p49
        %p383 = pneg %p46
        %p384 = pneg %p70
        %p385 = pneg %p67
        %p386 = pneg %p91
        %p387 = pneg %p88
        %p388 = pneg %p112
        %p389 = pneg %p109
        %p390 = pneg %p133
        %p391 = pneg %p130
        %p392 = pneg %p154
        %p393 = pneg %p151
        %p394 = pneg %p175
        %p395 = pneg %p172
        %p396 = pneg %p196
        %p397 = pneg %p193
        %p398 = pneg %p222
        %p399 = pneg %p219
        %s400 = sand.u32 %s209, 1
        %s401 = scalar_lea.sflag [#allocation4], %s400
        %s402 = sand.u32 %s209, 1
        %s403 = smul.addr %s402, 32
        %s404 = scalar_lea.vmem [#allocation14], %s403
        %v405 = vld [vmem:[%s348] sm:$0xff]
        %v406 = vld [vmem:[%s348 + $0x8] sm:$0xff]
        %v407 = vld [vmem:[%s348 + $0x10] sm:$0xff]
        %v408 = vld [vmem:[%s348 + $0x18] sm:$0xff]
        %v409 = vld [vmem:[#allocation5] sm:$0xff]
        %v410 = vld [vmem:[#allocation5 + $0x8] sm:$0xff]
        %v411 = vld [vmem:[#allocation5 + $0x10] sm:$0xff]
        %v412 = vld [vmem:[#allocation5 + $0x18] sm:$0xff]
        %v413 = vld [vmem:[#allocation5 + $0x20] sm:$0xff]
        %v414 = vld [vmem:[#allocation5 + $0x28] sm:$0xff]
        %v415 = vld [vmem:[#allocation5 + $0x30] sm:$0xff]
        %v416 = vld [vmem:[#allocation5 + $0x38] sm:$0xff]
        %v417 = vld [vmem:[#allocation5 + $0x40] sm:$0xff]
        %v418 = vld [vmem:[#allocation5 + $0x48] sm:$0xff]
        %v419 = vld [vmem:[#allocation5 + $0x50] sm:$0xff]
        %v420 = vld [vmem:[#allocation5 + $0x58] sm:$0xff]
        %v421 = vld [vmem:[#allocation5 + $0x60] sm:$0xff]
        %v422 = vld [vmem:[#allocation5 + $0x68] sm:$0xff]
        %v423 = vld [vmem:[#allocation5 + $0x70] sm:$0xff]
        %v424 = vld [vmem:[#allocation5 + $0x78] sm:$0xff]
        %v425 = vld [vmem:[#allocation5 + $0x80] sm:$0xff]
        %v426 = vld [vmem:[#allocation5 + $0x88] sm:$0xff]
        %v427 = vld [vmem:[#allocation5 + $0x90] sm:$0xff]
        %v428 = vld [vmem:[#allocation5 + $0x98] sm:$0xff]
        %v429 = vld [vmem:[#allocation5 + $0xa0] sm:$0xff]
        %v430 = vld [vmem:[#allocation5 + $0xa8] sm:$0xff]
        %v431 = vld [vmem:[#allocation5 + $0xb0] sm:$0xff]
        %v432 = vld [vmem:[#allocation5 + $0xb8] sm:$0xff]
        %v433 = vld [vmem:[#allocation5 + $0xc0] sm:$0xff]
        %v434 = vld [vmem:[#allocation5 + $0xc8] sm:$0xff]
        %v435 = vld [vmem:[#allocation5 + $0xd0] sm:$0xff]
        %v436 = vld [vmem:[#allocation5 + $0xd8] sm:$0xff]
        %v437 = vld [vmem:[#allocation5 + $0xe0] sm:$0xff]
        %v438 = vld [vmem:[#allocation5 + $0xe8] sm:$0xff]
        %v439 = vld [vmem:[#allocation5 + $0xf0] sm:$0xff]
        %v440 = vld [vmem:[#allocation5 + $0xf8] sm:$0xff]
        %s441 = scalar_lea.vmem [#allocation5], 256
        %v442 = vld [vmem:[%s441] sm:$0xff]
        %v443 = vld [vmem:[%s441 + $0x8] sm:$0xff]
        %v444 = vld [vmem:[%s441 + $0x10] sm:$0xff]
        %v445 = vld [vmem:[%s441 + $0x18] sm:$0xff]
        %v446 = vld [vmem:[%s441 + $0x20] sm:$0xff]
        %v447 = vld [vmem:[%s441 + $0x28] sm:$0xff]
        %v448 = vld [vmem:[%s441 + $0x30] sm:$0xff]
        %v449 = vld [vmem:[%s441 + $0x38] sm:$0xff]
        %v450 = vld [vmem:[%s441 + $0x40] sm:$0xff]
        %v451 = vld [vmem:[%s441 + $0x48] sm:$0xff]
        %v452 = vld [vmem:[%s441 + $0x50] sm:$0xff]
        %v453 = vld [vmem:[%s441 + $0x58] sm:$0xff]
        %v454 = vld [vmem:[%s441 + $0x60] sm:$0xff]
        %v455 = vld [vmem:[%s441 + $0x68] sm:$0xff]
        %v456 = vld [vmem:[%s441 + $0x70] sm:$0xff]
        %v457 = vld [vmem:[%s441 + $0x78] sm:$0xff]
        %v458 = vld [vmem:[%s441 + $0x80] sm:$0xff]
        %v459 = vld [vmem:[%s441 + $0x88] sm:$0xff]
        %v460 = vld [vmem:[%s441 + $0x90] sm:$0xff]
        %v461 = vld [vmem:[%s441 + $0x98] sm:$0xff]
        %v462 = vld [vmem:[%s441 + $0xa0] sm:$0xff]
        %v463 = vld [vmem:[%s441 + $0xa8] sm:$0xff]
        %v464 = vld [vmem:[%s441 + $0xb0] sm:$0xff]
        %v465 = vld [vmem:[%s441 + $0xb8] sm:$0xff]
        %v466 = vld [vmem:[%s441 + $0xc0] sm:$0xff]
        %v467 = vld [vmem:[%s441 + $0xc8] sm:$0xff]
        %v468 = vld [vmem:[%s441 + $0xd0] sm:$0xff]
        %v469 = vld [vmem:[%s441 + $0xd8] sm:$0xff]
        %v470 = vld [vmem:[%s441 + $0xe0] sm:$0xff]
        %v471 = vld [vmem:[%s441 + $0xe8] sm:$0xff]
        %v472 = vld [vmem:[%s441 + $0xf0] sm:$0xff]
        %v473 = vld [vmem:[%s441 + $0xf8] sm:$0xff]
        %vm477 = vcmask 1043456
        %v478 = vrot.slane %v405, 4
        %v479 = vrot.slane %v406, 4
        %v480 = vsel %vm477, %v478, %v479
        %v481 = vrot.slane %v407, 4
        %v482 = vsel %vm477, %v479, %v481
        %485 = vmatprep.subr.mxu0 %v473
        %486 = vmatpush1.msra.mxu0 %v472
        %487 = vmatprep.subr.mxu0 %v471
        %488 = vmatpush1.msra.mxu0 %v470
        %489 = vmatprep.subr.mxu0 %v469
        %490 = vmatpush1.msra.mxu0 %v468
        %491 = vmatprep.subr.mxu0 %v467
        %492 = vmatpush1.msra.mxu0 %v466
        %493 = vmatprep.subr.mxu0 %v465
        %494 = vmatpush1.msra.mxu0 %v464
        %495 = vmatprep.subr.mxu0 %v463
        %496 = vmatpush1.msra.mxu0 %v462
        %497 = vmatprep.subr.mxu0 %v461
        %498 = vmatpush1.msra.mxu0 %v460
        %499 = vmatprep.subr.mxu0 %v459
        %500 = vmatpush1.msra.mxu0 %v458
        %501 = vmatprep.subr.mxu0 %v457
        %502 = vmatpush1.msra.mxu0 %v456
        %503 = vmatprep.subr.mxu0 %v455
        %504 = vmatpush1.msra.mxu0 %v454
        %505 = vmatprep.subr.mxu0 %v453
        %506 = vmatpush1.msra.mxu0 %v452
        %507 = vmatprep.subr.mxu0 %v451
        %508 = vmatpush1.msra.mxu0 %v450
        %509 = vmatprep.subr.mxu0 %v449
        %510 = vmatpush1.msra.mxu0 %v448
        %511 = vmatprep.subr.mxu0 %v447
        %512 = vmatpush1.msra.mxu0 %v446
        %513 = vmatprep.subr.mxu0 %v445
        %514 = vmatpush1.msra.mxu0 %v444
        %515 = vmatprep.subr.mxu0 %v443
        %516 = vmatpush1.msra.mxu0 %v442
        %517 = vmatprep.subr.mxu0 0.0
        %518 = vmatpush2.msra.mxu0 0.0
        %519 = vmatprep.subr.mxu0 0.0
        %520 = vmatpush2.msra.mxu0 0.0
        %521 = vmatprep.subr.mxu0 0.0
        %522 = vmatpush2.msra.mxu0 0.0
        %523 = vmatprep.subr.mxu0 0.0
        %524 = vmatpush2.msra.mxu0 0.0
        %525 = vmatprep.subr.mxu0 0.0
        %526 = vmatpush2.msra.mxu0 0.0
        %527 = vmatprep.subr.mxu0 0.0
        %528 = vmatpush2.msra.mxu0 0.0
        %529 = vmatprep.subr.mxu0 0.0
        %530 = vmatpush2.msra.mxu0 0.0
        %531 = vmatprep.subr.mxu0 0.0
        %532 = vmatpush2.msra.mxu0 0.0
        %533 = vmatprep.subr.mxu0 0.0
        %534 = vmatpush2.msra.mxu0 0.0
        %535 = vmatprep.subr.mxu0 0.0
        %536 = vmatpush2.msra.mxu0 0.0
        %537 = vmatprep.subr.mxu0 0.0
        %538 = vmatpush2.msra.mxu0 0.0
        %539 = vmatprep.subr.mxu0 0.0
        %540 = vmatpush2.msra.mxu0 0.0
        %541 = vmatprep.subr.mxu0 0.0
        %542 = vmatpush2.msra.mxu0 0.0
        %543 = vmatprep.subr.mxu0 0.0
        %544 = vmatpush2.msra.mxu0 0.0
        %545 = vmatprep.subr.mxu0 0.0
        %546 = vmatpush2.msra.mxu0 0.0
        %547 = vmatprep.subr.mxu0 0.0
        %548 = vmatpush2.msra.mxu0 0.0
        %549 = vmatprep.mubr.f32.mxu0 0.0
        %550 = vmatmul.mubr.f32.gmra.mxu0 %v480
        %v551 = vpop.f32.mrf.mxu0
        %v552 = vadd.f32 0.0, %v551
        %v553 = vpop.f32.mrf.mxu0
        %v554 = vadd.f32 0.0, %v553
        %555 = vmatprep.mubr.f32.mxu0 0.0
        %556 = vmatmul.mubr.f32.gmra.mxu0 %v482
        %v557 = vpop.f32.mrf.mxu0
        %v558 = vadd.f32 0.0, %v557
        %v559 = vpop.f32.mrf.mxu0
        %v560 = vadd.f32 0.0, %v559
        %561 = vdwg.mxu0
        %562 = vmatprep.subr.mxu0 %v440
        %563 = vmatpush1.msra.mxu0 %v439
        %564 = vmatprep.subr.mxu0 %v438
        %565 = vmatpush1.msra.mxu0 %v437
        %566 = vmatprep.subr.mxu0 %v436
        %567 = vmatpush1.msra.mxu0 %v435
        %568 = vmatprep.subr.mxu0 %v434
        %569 = vmatpush1.msra.mxu0 %v433
        %570 = vmatprep.subr.mxu0 %v432
        %571 = vmatpush1.msra.mxu0 %v431
        %572 = vmatprep.subr.mxu0 %v430
        %573 = vmatpush1.msra.mxu0 %v429
        %574 = vmatprep.subr.mxu0 %v428
        %575 = vmatpush1.msra.mxu0 %v427
        %576 = vmatprep.subr.mxu0 %v426
        %577 = vmatpush1.msra.mxu0 %v425
        %578 = vmatprep.subr.mxu0 %v424
        %579 = vmatpush1.msra.mxu0 %v423
        %580 = vmatprep.subr.mxu0 %v422
        %581 = vmatpush1.msra.mxu0 %v421
        %582 = vmatprep.subr.mxu0 %v420
        %583 = vmatpush1.msra.mxu0 %v419
        %584 = vmatprep.subr.mxu0 %v418
        %585 = vmatpush1.msra.mxu0 %v417
        %586 = vmatprep.subr.mxu0 %v416
        %587 = vmatpush1.msra.mxu0 %v415
        %588 = vmatprep.subr.mxu0 %v414
        %589 = vmatpush1.msra.mxu0 %v413
        %590 = vmatprep.subr.mxu0 %v412
        %591 = vmatpush1.msra.mxu0 %v411
        %592 = vmatprep.subr.mxu0 %v410
        %593 = vmatpush1.msra.mxu0 %v409
        %594 = vmatprep.subr.mxu0 0.0
        %595 = vmatpush2.msra.mxu0 0.0
        %596 = vmatprep.subr.mxu0 0.0
        %597 = vmatpush2.msra.mxu0 0.0
        %598 = vmatprep.subr.mxu0 0.0
        %599 = vmatpush2.msra.mxu0 0.0
        %600 = vmatprep.subr.mxu0 0.0
        %601 = vmatpush2.msra.mxu0 0.0
        %602 = vmatprep.subr.mxu0 0.0
        %603 = vmatpush2.msra.mxu0 0.0
        %604 = vmatprep.subr.mxu0 0.0
        %605 = vmatpush2.msra.mxu0 0.0
        %606 = vmatprep.subr.mxu0 0.0
        %607 = vmatpush2.msra.mxu0 0.0
        %608 = vmatprep.subr.mxu0 0.0
        %609 = vmatpush2.msra.mxu0 0.0
        %610 = vmatprep.subr.mxu0 0.0
        %611 = vmatpush2.msra.mxu0 0.0
        %612 = vmatprep.subr.mxu0 0.0
        %613 = vmatpush2.msra.mxu0 0.0
        %614 = vmatprep.subr.mxu0 0.0
        %615 = vmatpush2.msra.mxu0 0.0
        %616 = vmatprep.subr.mxu0 0.0
        %617 = vmatpush2.msra.mxu0 0.0
        %618 = vmatprep.subr.mxu0 0.0
        %619 = vmatpush2.msra.mxu0 0.0
        %620 = vmatprep.subr.mxu0 0.0
        %621 = vmatpush2.msra.mxu0 0.0
        %622 = vmatprep.subr.mxu0 0.0
        %623 = vmatpush2.msra.mxu0 0.0
        %624 = vmatprep.subr.mxu0 0.0
        %625 = vmatpush2.msra.mxu0 0.0
        %626 = vmatprep.mubr.f32.mxu0 0.0
        %627 = vmatmul.mubr.f32.gmra.mxu0 %v405
        %v628 = vpop.f32.mrf.mxu0
        %v629 = vadd.f32 %v552, %v628
        %v630 = vpop.f32.mrf.mxu0
        %v631 = vadd.f32 %v554, %v630
        %632 = vmatprep.mubr.f32.mxu0 0.0
        %633 = vmatmul.mubr.f32.gmra.mxu0 %v406
        %v634 = vpop.f32.mrf.mxu0
        %v635 = vadd.f32 %v558, %v634
        %v636 = vpop.f32.mrf.mxu0
        %v637 = vadd.f32 %v560, %v636
        %638 = vdwg.mxu0
        %s639 = scalar_lea.vmem [#allocation5], 512
        %v640 = vld [vmem:[%s639] sm:$0xff]
        %v641 = vld [vmem:[%s639 + $0x8] sm:$0xff]
        %v642 = vld [vmem:[%s639 + $0x10] sm:$0xff]
        %v643 = vld [vmem:[%s639 + $0x18] sm:$0xff]
        %v644 = vld [vmem:[%s639 + $0x20] sm:$0xff]
        %v645 = vld [vmem:[%s639 + $0x28] sm:$0xff]
        %v646 = vld [vmem:[%s639 + $0x30] sm:$0xff]
        %v647 = vld [vmem:[%s639 + $0x38] sm:$0xff]
        %v648 = vld [vmem:[%s639 + $0x40] sm:$0xff]
        %v649 = vld [vmem:[%s639 + $0x48] sm:$0xff]
        %v650 = vld [vmem:[%s639 + $0x50] sm:$0xff]
        %v651 = vld [vmem:[%s639 + $0x58] sm:$0xff]
        %v652 = vld [vmem:[%s639 + $0x60] sm:$0xff]
        %v653 = vld [vmem:[%s639 + $0x68] sm:$0xff]
        %v654 = vld [vmem:[%s639 + $0x70] sm:$0xff]
        %v655 = vld [vmem:[%s639 + $0x78] sm:$0xff]
        %v656 = vld [vmem:[%s639 + $0x80] sm:$0xff]
        %v657 = vld [vmem:[%s639 + $0x88] sm:$0xff]
        %v658 = vld [vmem:[%s639 + $0x90] sm:$0xff]
        %v659 = vld [vmem:[%s639 + $0x98] sm:$0xff]
        %v660 = vld [vmem:[%s639 + $0xa0] sm:$0xff]
        %v661 = vld [vmem:[%s639 + $0xa8] sm:$0xff]
        %v662 = vld [vmem:[%s639 + $0xb0] sm:$0xff]
        %v663 = vld [vmem:[%s639 + $0xb8] sm:$0xff]
        %v664 = vld [vmem:[%s639 + $0xc0] sm:$0xff]
        %v665 = vld [vmem:[%s639 + $0xc8] sm:$0xff]
        %v666 = vld [vmem:[%s639 + $0xd0] sm:$0xff]
        %v667 = vld [vmem:[%s639 + $0xd8] sm:$0xff]
        %v668 = vld [vmem:[%s639 + $0xe0] sm:$0xff]
        %v669 = vld [vmem:[%s639 + $0xe8] sm:$0xff]
        %v670 = vld [vmem:[%s639 + $0xf0] sm:$0xff]
        %v671 = vld [vmem:[%s639 + $0xf8] sm:$0xff]
        %vm672 = vcmask 1041408
        %v673 = vrot.slane %v405, 6
        %v674 = vrot.slane %v406, 6
        %v675 = vsel %vm672, %v673, %v674
        %v676 = vrot.slane %v407, 6
        %v677 = vsel %vm672, %v674, %v676
        %680 = vmatprep.subr.mxu0 %v671
        %681 = vmatpush1.msra.mxu0 %v670
        %682 = vmatprep.subr.mxu0 %v669
        %683 = vmatpush1.msra.mxu0 %v668
        %684 = vmatprep.subr.mxu0 %v667
        %685 = vmatpush1.msra.mxu0 %v666
        %686 = vmatprep.subr.mxu0 %v665
        %687 = vmatpush1.msra.mxu0 %v664
        %688 = vmatprep.subr.mxu0 %v663
        %689 = vmatpush1.msra.mxu0 %v662
        %690 = vmatprep.subr.mxu0 %v661
        %691 = vmatpush1.msra.mxu0 %v660
        %692 = vmatprep.subr.mxu0 %v659
        %693 = vmatpush1.msra.mxu0 %v658
        %694 = vmatprep.subr.mxu0 %v657
        %695 = vmatpush1.msra.mxu0 %v656
        %696 = vmatprep.subr.mxu0 %v655
        %697 = vmatpush1.msra.mxu0 %v654
        %698 = vmatprep.subr.mxu0 %v653
        %699 = vmatpush1.msra.mxu0 %v652
        %700 = vmatprep.subr.mxu0 %v651
        %701 = vmatpush1.msra.mxu0 %v650
        %702 = vmatprep.subr.mxu0 %v649
        %703 = vmatpush1.msra.mxu0 %v648
        %704 = vmatprep.subr.mxu0 %v647
        %705 = vmatpush1.msra.mxu0 %v646
        %706 = vmatprep.subr.mxu0 %v645
        %707 = vmatpush1.msra.mxu0 %v644
        %708 = vmatprep.subr.mxu0 %v643
        %709 = vmatpush1.msra.mxu0 %v642
        %710 = vmatprep.subr.mxu0 %v641
        %711 = vmatpush1.msra.mxu0 %v640
        %712 = vmatprep.subr.mxu0 0.0
        %713 = vmatpush2.msra.mxu0 0.0
        %714 = vmatprep.subr.mxu0 0.0
        %715 = vmatpush2.msra.mxu0 0.0
        %716 = vmatprep.subr.mxu0 0.0
        %717 = vmatpush2.msra.mxu0 0.0
        %718 = vmatprep.subr.mxu0 0.0
        %719 = vmatpush2.msra.mxu0 0.0
        %720 = vmatprep.subr.mxu0 0.0
        %721 = vmatpush2.msra.mxu0 0.0
        %722 = vmatprep.subr.mxu0 0.0
        %723 = vmatpush2.msra.mxu0 0.0
        %724 = vmatprep.subr.mxu0 0.0
        %725 = vmatpush2.msra.mxu0 0.0
        %726 = vmatprep.subr.mxu0 0.0
        %727 = vmatpush2.msra.mxu0 0.0
        %728 = vmatprep.subr.mxu0 0.0
        %729 = vmatpush2.msra.mxu0 0.0
        %730 = vmatprep.subr.mxu0 0.0
        %731 = vmatpush2.msra.mxu0 0.0
        %732 = vmatprep.subr.mxu0 0.0
        %733 = vmatpush2.msra.mxu0 0.0
        %734 = vmatprep.subr.mxu0 0.0
        %735 = vmatpush2.msra.mxu0 0.0
        %736 = vmatprep.subr.mxu0 0.0
        %737 = vmatpush2.msra.mxu0 0.0
        %738 = vmatprep.subr.mxu0 0.0
        %739 = vmatpush2.msra.mxu0 0.0
        %740 = vmatprep.subr.mxu0 0.0
        %741 = vmatpush2.msra.mxu0 0.0
        %742 = vmatprep.subr.mxu0 0.0
        %743 = vmatpush2.msra.mxu0 0.0
        %744 = vmatprep.mubr.f32.mxu0 0.0
        %745 = vmatmul.mubr.f32.gmra.mxu0 %v675
        %v746 = vpop.f32.mrf.mxu0
        %v747 = vadd.f32 0.0, %v746
        %v748 = vpop.f32.mrf.mxu0
        %v749 = vadd.f32 0.0, %v748
        %750 = vmatprep.mubr.f32.mxu0 0.0
        %751 = vmatmul.mubr.f32.gmra.mxu0 %v677
        %v752 = vpop.f32.mrf.mxu0
        %v753 = vadd.f32 0.0, %v752
        %v754 = vpop.f32.mrf.mxu0
        %v755 = vadd.f32 0.0, %v754
        %756 = vdwg.mxu0
        %v757 = vadd.f32 %v629, %v747
        %v758 = vadd.f32 %v631, %v749
        %v759 = vadd.f32 %v635, %v753
        %v760 = vadd.f32 %v637, %v755
        %s761 = scalar_lea.vmem [#allocation5], 768
        %v762 = vld [vmem:[%s761] sm:$0xff]
        %v763 = vld [vmem:[%s761 + $0x8] sm:$0xff]
        %v764 = vld [vmem:[%s761 + $0x10] sm:$0xff]
        %v765 = vld [vmem:[%s761 + $0x18] sm:$0xff]
        %v766 = vld [vmem:[%s761 + $0x20] sm:$0xff]
        %v767 = vld [vmem:[%s761 + $0x28] sm:$0xff]
        %v768 = vld [vmem:[%s761 + $0x30] sm:$0xff]
        %v769 = vld [vmem:[%s761 + $0x38] sm:$0xff]
        %v770 = vld [vmem:[%s761 + $0x40] sm:$0xff]
        %v771 = vld [vmem:[%s761 + $0x48] sm:$0xff]
        %v772 = vld [vmem:[%s761 + $0x50] sm:$0xff]
        %v773 = vld [vmem:[%s761 + $0x58] sm:$0xff]
        %v774 = vld [vmem:[%s761 + $0x60] sm:$0xff]
        %v775 = vld [vmem:[%s761 + $0x68] sm:$0xff]
        %v776 = vld [vmem:[%s761 + $0x70] sm:$0xff]
        %v777 = vld [vmem:[%s761 + $0x78] sm:$0xff]
        %v778 = vld [vmem:[%s761 + $0x80] sm:$0xff]
        %v779 = vld [vmem:[%s761 + $0x88] sm:$0xff]
        %v780 = vld [vmem:[%s761 + $0x90] sm:$0xff]
        %v781 = vld [vmem:[%s761 + $0x98] sm:$0xff]
        %v782 = vld [vmem:[%s761 + $0xa0] sm:$0xff]
        %v783 = vld [vmem:[%s761 + $0xa8] sm:$0xff]
        %v784 = vld [vmem:[%s761 + $0xb0] sm:$0xff]
        %v785 = vld [vmem:[%s761 + $0xb8] sm:$0xff]
        %v786 = vld [vmem:[%s761 + $0xc0] sm:$0xff]
        %v787 = vld [vmem:[%s761 + $0xc8] sm:$0xff]
        %v788 = vld [vmem:[%s761 + $0xd0] sm:$0xff]
        %v789 = vld [vmem:[%s761 + $0xd8] sm:$0xff]
        %v790 = vld [vmem:[%s761 + $0xe0] sm:$0xff]
        %v791 = vld [vmem:[%s761 + $0xe8] sm:$0xff]
        %v792 = vld [vmem:[%s761 + $0xf0] sm:$0xff]
        %v793 = vld [vmem:[%s761 + $0xf8] sm:$0xff]
        %vm794 = vcmask 1040384
        %v795 = vrot.slane %v405, 7
        %v796 = vrot.slane %v406, 7
        %v797 = vsel %vm794, %v795, %v796
        %v798 = vrot.slane %v407, 7
        %v799 = vsel %vm794, %v796, %v798
        %802 = vmatprep.subr.mxu0 %v793
        %803 = vmatpush1.msra.mxu0 %v792
        %804 = vmatprep.subr.mxu0 %v791
        %805 = vmatpush1.msra.mxu0 %v790
        %806 = vmatprep.subr.mxu0 %v789
        %807 = vmatpush1.msra.mxu0 %v788
        %808 = vmatprep.subr.mxu0 %v787
        %809 = vmatpush1.msra.mxu0 %v786
        %810 = vmatprep.subr.mxu0 %v785
        %811 = vmatpush1.msra.mxu0 %v784
        %812 = vmatprep.subr.mxu0 %v783
        %813 = vmatpush1.msra.mxu0 %v782
        %814 = vmatprep.subr.mxu0 %v781
        %815 = vmatpush1.msra.mxu0 %v780
        %816 = vmatprep.subr.mxu0 %v779
        %817 = vmatpush1.msra.mxu0 %v778
        %818 = vmatprep.subr.mxu0 %v777
        %819 = vmatpush1.msra.mxu0 %v776
        %820 = vmatprep.subr.mxu0 %v775
        %821 = vmatpush1.msra.mxu0 %v774
        %822 = vmatprep.subr.mxu0 %v773
        %823 = vmatpush1.msra.mxu0 %v772
        %824 = vmatprep.subr.mxu0 %v771
        %825 = vmatpush1.msra.mxu0 %v770
        %826 = vmatprep.subr.mxu0 %v769
        %827 = vmatpush1.msra.mxu0 %v768
        %828 = vmatprep.subr.mxu0 %v767
        %829 = vmatpush1.msra.mxu0 %v766
        %830 = vmatprep.subr.mxu0 %v765
        %831 = vmatpush1.msra.mxu0 %v764
        %832 = vmatprep.subr.mxu0 %v763
        %833 = vmatpush1.msra.mxu0 %v762
        %834 = vmatprep.subr.mxu0 0.0
        %835 = vmatpush2.msra.mxu0 0.0
        %836 = vmatprep.subr.mxu0 0.0
        %837 = vmatpush2.msra.mxu0 0.0
        %838 = vmatprep.subr.mxu0 0.0
        %839 = vmatpush2.msra.mxu0 0.0
        %840 = vmatprep.subr.mxu0 0.0
        %841 = vmatpush2.msra.mxu0 0.0
        %842 = vmatprep.subr.mxu0 0.0
        %843 = vmatpush2.msra.mxu0 0.0
        %844 = vmatprep.subr.mxu0 0.0
        %845 = vmatpush2.msra.mxu0 0.0
        %846 = vmatprep.subr.mxu0 0.0
        %847 = vmatpush2.msra.mxu0 0.0
        %848 = vmatprep.subr.mxu0 0.0
        %849 = vmatpush2.msra.mxu0 0.0
        %850 = vmatprep.subr.mxu0 0.0
        %851 = vmatpush2.msra.mxu0 0.0
        %852 = vmatprep.subr.mxu0 0.0
        %853 = vmatpush2.msra.mxu0 0.0
        %854 = vmatprep.subr.mxu0 0.0
        %855 = vmatpush2.msra.mxu0 0.0
        %856 = vmatprep.subr.mxu0 0.0
        %857 = vmatpush2.msra.mxu0 0.0
        %858 = vmatprep.subr.mxu0 0.0
        %859 = vmatpush2.msra.mxu0 0.0
        %860 = vmatprep.subr.mxu0 0.0
        %861 = vmatpush2.msra.mxu0 0.0
        %862 = vmatprep.subr.mxu0 0.0
        %863 = vmatpush2.msra.mxu0 0.0
        %864 = vmatprep.subr.mxu0 0.0
        %865 = vmatpush2.msra.mxu0 0.0
        %866 = vmatprep.mubr.f32.mxu0 0.0
        %867 = vmatmul.mubr.f32.gmra.mxu0 %v797
        %v868 = vpop.f32.mrf.mxu0
        %v869 = vadd.f32 0.0, %v868
        %v870 = vpop.f32.mrf.mxu0
        %v871 = vadd.f32 0.0, %v870
        %872 = vmatprep.mubr.f32.mxu0 0.0
        %873 = vmatmul.mubr.f32.gmra.mxu0 %v799
        %v874 = vpop.f32.mrf.mxu0
        %v875 = vadd.f32 0.0, %v874
        %v876 = vpop.f32.mrf.mxu0
        %v877 = vadd.f32 0.0, %v876
        %878 = vdwg.mxu0
        %v879 = vadd.f32 %v757, %v869
        %v880 = vadd.f32 %v758, %v871
        %v881 = vadd.f32 %v759, %v875
        %v882 = vadd.f32 %v760, %v877
        %s883 = scalar_lea.vmem [#allocation5], 1024
        %v884 = vld [vmem:[%s883] sm:$0xff]
        %v885 = vld [vmem:[%s883 + $0x8] sm:$0xff]
        %v886 = vld [vmem:[%s883 + $0x10] sm:$0xff]
        %v887 = vld [vmem:[%s883 + $0x18] sm:$0xff]
        %v888 = vld [vmem:[%s883 + $0x20] sm:$0xff]
        %v889 = vld [vmem:[%s883 + $0x28] sm:$0xff]
        %v890 = vld [vmem:[%s883 + $0x30] sm:$0xff]
        %v891 = vld [vmem:[%s883 + $0x38] sm:$0xff]
        %v892 = vld [vmem:[%s883 + $0x40] sm:$0xff]
        %v893 = vld [vmem:[%s883 + $0x48] sm:$0xff]
        %v894 = vld [vmem:[%s883 + $0x50] sm:$0xff]
        %v895 = vld [vmem:[%s883 + $0x58] sm:$0xff]
        %v896 = vld [vmem:[%s883 + $0x60] sm:$0xff]
        %v897 = vld [vmem:[%s883 + $0x68] sm:$0xff]
        %v898 = vld [vmem:[%s883 + $0x70] sm:$0xff]
        %v899 = vld [vmem:[%s883 + $0x78] sm:$0xff]
        %v900 = vld [vmem:[%s883 + $0x80] sm:$0xff]
        %v901 = vld [vmem:[%s883 + $0x88] sm:$0xff]
        %v902 = vld [vmem:[%s883 + $0x90] sm:$0xff]
        %v903 = vld [vmem:[%s883 + $0x98] sm:$0xff]
        %v904 = vld [vmem:[%s883 + $0xa0] sm:$0xff]
        %v905 = vld [vmem:[%s883 + $0xa8] sm:$0xff]
        %v906 = vld [vmem:[%s883 + $0xb0] sm:$0xff]
        %v907 = vld [vmem:[%s883 + $0xb8] sm:$0xff]
        %v908 = vld [vmem:[%s883 + $0xc0] sm:$0xff]
        %v909 = vld [vmem:[%s883 + $0xc8] sm:$0xff]
        %v910 = vld [vmem:[%s883 + $0xd0] sm:$0xff]
        %v911 = vld [vmem:[%s883 + $0xd8] sm:$0xff]
        %v912 = vld [vmem:[%s883 + $0xe0] sm:$0xff]
        %v913 = vld [vmem:[%s883 + $0xe8] sm:$0xff]
        %v914 = vld [vmem:[%s883 + $0xf0] sm:$0xff]
        %v915 = vld [vmem:[%s883 + $0xf8] sm:$0xff]
        %916 = vmatprep.subr.mxu0 %v915
        %917 = vmatpush1.msra.mxu0 %v914
        %918 = vmatprep.subr.mxu0 %v913
        %919 = vmatpush1.msra.mxu0 %v912
        %920 = vmatprep.subr.mxu0 %v911
        %921 = vmatpush1.msra.mxu0 %v910
        %922 = vmatprep.subr.mxu0 %v909
        %923 = vmatpush1.msra.mxu0 %v908
        %924 = vmatprep.subr.mxu0 %v907
        %925 = vmatpush1.msra.mxu0 %v906
        %926 = vmatprep.subr.mxu0 %v905
        %927 = vmatpush1.msra.mxu0 %v904
        %928 = vmatprep.subr.mxu0 %v903
        %929 = vmatpush1.msra.mxu0 %v902
        %930 = vmatprep.subr.mxu0 %v901
        %931 = vmatpush1.msra.mxu0 %v900
        %932 = vmatprep.subr.mxu0 %v899
        %933 = vmatpush1.msra.mxu0 %v898
        %934 = vmatprep.subr.mxu0 %v897
        %935 = vmatpush1.msra.mxu0 %v896
        %936 = vmatprep.subr.mxu0 %v895
        %937 = vmatpush1.msra.mxu0 %v894
        %938 = vmatprep.subr.mxu0 %v893
        %939 = vmatpush1.msra.mxu0 %v892
        %940 = vmatprep.subr.mxu0 %v891
        %941 = vmatpush1.msra.mxu0 %v890
        %942 = vmatprep.subr.mxu0 %v889
        %943 = vmatpush1.msra.mxu0 %v888
        %944 = vmatprep.subr.mxu0 %v887
        %945 = vmatpush1.msra.mxu0 %v886
        %946 = vmatprep.subr.mxu0 %v885
        %947 = vmatpush1.msra.mxu0 %v884
        %948 = vmatprep.subr.mxu0 0.0
        %949 = vmatpush2.msra.mxu0 0.0
        %950 = vmatprep.subr.mxu0 0.0
        %951 = vmatpush2.msra.mxu0 0.0
        %952 = vmatprep.subr.mxu0 0.0
        %953 = vmatpush2.msra.mxu0 0.0
        %954 = vmatprep.subr.mxu0 0.0
        %955 = vmatpush2.msra.mxu0 0.0
        %956 = vmatprep.subr.mxu0 0.0
        %957 = vmatpush2.msra.mxu0 0.0
        %958 = vmatprep.subr.mxu0 0.0
        %959 = vmatpush2.msra.mxu0 0.0
        %960 = vmatprep.subr.mxu0 0.0
        %961 = vmatpush2.msra.mxu0 0.0
        %962 = vmatprep.subr.mxu0 0.0
        %963 = vmatpush2.msra.mxu0 0.0
        %964 = vmatprep.subr.mxu0 0.0
        %965 = vmatpush2.msra.mxu0 0.0
        %966 = vmatprep.subr.mxu0 0.0
        %967 = vmatpush2.msra.mxu0 0.0
        %968 = vmatprep.subr.mxu0 0.0
        %969 = vmatpush2.msra.mxu0 0.0
        %970 = vmatprep.subr.mxu0 0.0
        %971 = vmatpush2.msra.mxu0 0.0
        %972 = vmatprep.subr.mxu0 0.0
        %973 = vmatpush2.msra.mxu0 0.0
        %974 = vmatprep.subr.mxu0 0.0
        %975 = vmatpush2.msra.mxu0 0.0
        %976 = vmatprep.subr.mxu0 0.0
        %977 = vmatpush2.msra.mxu0 0.0
        %978 = vmatprep.subr.mxu0 0.0
        %979 = vmatpush2.msra.mxu0 0.0
        %980 = vmatprep.mubr.f32.mxu0 0.0
        %981 = vmatmul.mubr.f32.gmra.mxu0 %v406
        %v982 = vpop.f32.mrf.mxu0
        %v983 = vadd.f32 0.0, %v982
        %v984 = vpop.f32.mrf.mxu0
        %v985 = vadd.f32 0.0, %v984
        %986 = vmatprep.mubr.f32.mxu0 0.0
        %987 = vmatmul.mubr.f32.gmra.mxu0 %v407
        %v988 = vpop.f32.mrf.mxu0
        %v989 = vadd.f32 0.0, %v988
        %v990 = vpop.f32.mrf.mxu0
        %v991 = vadd.f32 0.0, %v990
        %992 = vdwg.mxu0
        %v993 = vadd.f32 %v879, %v983
        %v994 = vadd.f32 %v880, %v985
        %v995 = vadd.f32 %v881, %v989
        %v996 = vadd.f32 %v882, %v991
        %s997 = scalar_lea.vmem [#allocation5], 1280
        %v998 = vld [vmem:[%s997] sm:$0xff]
        %v999 = vld [vmem:[%s997 + $0x8] sm:$0xff]
        %v1000 = vld [vmem:[%s997 + $0x10] sm:$0xff]
        %v1001 = vld [vmem:[%s997 + $0x18] sm:$0xff]
        %v1002 = vld [vmem:[%s997 + $0x20] sm:$0xff]
        %v1003 = vld [vmem:[%s997 + $0x28] sm:$0xff]
        %v1004 = vld [vmem:[%s997 + $0x30] sm:$0xff]
        %v1005 = vld [vmem:[%s997 + $0x38] sm:$0xff]
        %v1006 = vld [vmem:[%s997 + $0x40] sm:$0xff]
        %v1007 = vld [vmem:[%s997 + $0x48] sm:$0xff]
        %v1008 = vld [vmem:[%s997 + $0x50] sm:$0xff]
        %v1009 = vld [vmem:[%s997 + $0x58] sm:$0xff]
        %v1010 = vld [vmem:[%s997 + $0x60] sm:$0xff]
        %v1011 = vld [vmem:[%s997 + $0x68] sm:$0xff]
        %v1012 = vld [vmem:[%s997 + $0x70] sm:$0xff]
        %v1013 = vld [vmem:[%s997 + $0x78] sm:$0xff]
        %v1014 = vld [vmem:[%s997 + $0x80] sm:$0xff]
        %v1015 = vld [vmem:[%s997 + $0x88] sm:$0xff]
        %v1016 = vld [vmem:[%s997 + $0x90] sm:$0xff]
        %v1017 = vld [vmem:[%s997 + $0x98] sm:$0xff]
        %v1018 = vld [vmem:[%s997 + $0xa0] sm:$0xff]
        %v1019 = vld [vmem:[%s997 + $0xa8] sm:$0xff]
        %v1020 = vld [vmem:[%s997 + $0xb0] sm:$0xff]
        %v1021 = vld [vmem:[%s997 + $0xb8] sm:$0xff]
        %v1022 = vld [vmem:[%s997 + $0xc0] sm:$0xff]
        %v1023 = vld [vmem:[%s997 + $0xc8] sm:$0xff]
        %v1024 = vld [vmem:[%s997 + $0xd0] sm:$0xff]
        %v1025 = vld [vmem:[%s997 + $0xd8] sm:$0xff]
        %v1026 = vld [vmem:[%s997 + $0xe0] sm:$0xff]
        %v1027 = vld [vmem:[%s997 + $0xe8] sm:$0xff]
        %v1028 = vld [vmem:[%s997 + $0xf0] sm:$0xff]
        %v1029 = vld [vmem:[%s997 + $0xf8] sm:$0xff]
        %vm1031 = vcmask 1046528
        %v1032 = vrot.slane %v406, 1
        %v1033 = vrot.slane %v407, 1
        %v1034 = vsel %vm1031, %v1032, %v1033
        %v1035 = vrot.slane %v408, 1
        %v1036 = vsel %vm1031, %v1033, %v1035
        %1039 = vmatprep.subr.mxu0 %v1029
        %1040 = vmatpush1.msra.mxu0 %v1028
        %1041 = vmatprep.subr.mxu0 %v1027
        %1042 = vmatpush1.msra.mxu0 %v1026
        %1043 = vmatprep.subr.mxu0 %v1025
        %1044 = vmatpush1.msra.mxu0 %v1024
        %1045 = vmatprep.subr.mxu0 %v1023
        %1046 = vmatpush1.msra.mxu0 %v1022
        %1047 = vmatprep.subr.mxu0 %v1021
        %1048 = vmatpush1.msra.mxu0 %v1020
        %1049 = vmatprep.subr.mxu0 %v1019
        %1050 = vmatpush1.msra.mxu0 %v1018
        %1051 = vmatprep.subr.mxu0 %v1017
        %1052 = vmatpush1.msra.mxu0 %v1016
        %1053 = vmatprep.subr.mxu0 %v1015
        %1054 = vmatpush1.msra.mxu0 %v1014
        %1055 = vmatprep.subr.mxu0 %v1013
        %1056 = vmatpush1.msra.mxu0 %v1012
        %1057 = vmatprep.subr.mxu0 %v1011
        %1058 = vmatpush1.msra.mxu0 %v1010
        %1059 = vmatprep.subr.mxu0 %v1009
        %1060 = vmatpush1.msra.mxu0 %v1008
        %1061 = vmatprep.subr.mxu0 %v1007
        %1062 = vmatpush1.msra.mxu0 %v1006
        %1063 = vmatprep.subr.mxu0 %v1005
        %1064 = vmatpush1.msra.mxu0 %v1004
        %1065 = vmatprep.subr.mxu0 %v1003
        %1066 = vmatpush1.msra.mxu0 %v1002
        %1067 = vmatprep.subr.mxu0 %v1001
        %1068 = vmatpush1.msra.mxu0 %v1000
        %1069 = vmatprep.subr.mxu0 %v999
        %1070 = vmatpush1.msra.mxu0 %v998
        %1071 = vmatprep.subr.mxu0 0.0
        %1072 = vmatpush2.msra.mxu0 0.0
        %1073 = vmatprep.subr.mxu0 0.0
        %1074 = vmatpush2.msra.mxu0 0.0
        %1075 = vmatprep.subr.mxu0 0.0
        %1076 = vmatpush2.msra.mxu0 0.0
        %1077 = vmatprep.subr.mxu0 0.0
        %1078 = vmatpush2.msra.mxu0 0.0
        %1079 = vmatprep.subr.mxu0 0.0
        %1080 = vmatpush2.msra.mxu0 0.0
        %1081 = vmatprep.subr.mxu0 0.0
        %1082 = vmatpush2.msra.mxu0 0.0
        %1083 = vmatprep.subr.mxu0 0.0
        %1084 = vmatpush2.msra.mxu0 0.0
        %1085 = vmatprep.subr.mxu0 0.0
        %1086 = vmatpush2.msra.mxu0 0.0
        %1087 = vmatprep.subr.mxu0 0.0
        %1088 = vmatpush2.msra.mxu0 0.0
        %1089 = vmatprep.subr.mxu0 0.0
        %1090 = vmatpush2.msra.mxu0 0.0
        %1091 = vmatprep.subr.mxu0 0.0
        %1092 = vmatpush2.msra.mxu0 0.0
        %1093 = vmatprep.subr.mxu0 0.0
        %1094 = vmatpush2.msra.mxu0 0.0
        %1095 = vmatprep.subr.mxu0 0.0
        %1096 = vmatpush2.msra.mxu0 0.0
        %1097 = vmatprep.subr.mxu0 0.0
        %1098 = vmatpush2.msra.mxu0 0.0
        %1099 = vmatprep.subr.mxu0 0.0
        %1100 = vmatpush2.msra.mxu0 0.0
        %1101 = vmatprep.subr.mxu0 0.0
        %1102 = vmatpush2.msra.mxu0 0.0
        %1103 = vmatprep.mubr.f32.mxu0 0.0
        %1104 = vmatmul.mubr.f32.gmra.mxu0 %v1034
        %v1105 = vpop.f32.mrf.mxu0
        %v1106 = vadd.f32 0.0, %v1105
        %v1107 = vpop.f32.mrf.mxu0
        %v1108 = vadd.f32 0.0, %v1107
        %1109 = vmatprep.mubr.f32.mxu0 0.0
        %1110 = vmatmul.mubr.f32.gmra.mxu0 %v1036
        %v1111 = vpop.f32.mrf.mxu0
        %v1112 = vadd.f32 0.0, %v1111
        %v1113 = vpop.f32.mrf.mxu0
        %v1114 = vadd.f32 0.0, %v1113
        %1115 = vdwg.mxu0
        %v1116 = vadd.f32 %v993, %v1106
        %v1117 = vadd.f32 %v994, %v1108
        %v1118 = vadd.f32 %v995, %v1112
        %v1119 = vadd.f32 %v996, %v1114
        %s1120 = scalar_lea.vmem [#allocation5], 1536
        %v1121 = vld [vmem:[%s1120] sm:$0xff]
        %v1122 = vld [vmem:[%s1120 + $0x8] sm:$0xff]
        %v1123 = vld [vmem:[%s1120 + $0x10] sm:$0xff]
        %v1124 = vld [vmem:[%s1120 + $0x18] sm:$0xff]
        %v1125 = vld [vmem:[%s1120 + $0x20] sm:$0xff]
        %v1126 = vld [vmem:[%s1120 + $0x28] sm:$0xff]
        %v1127 = vld [vmem:[%s1120 + $0x30] sm:$0xff]
        %v1128 = vld [vmem:[%s1120 + $0x38] sm:$0xff]
        %v1129 = vld [vmem:[%s1120 + $0x40] sm:$0xff]
        %v1130 = vld [vmem:[%s1120 + $0x48] sm:$0xff]
        %v1131 = vld [vmem:[%s1120 + $0x50] sm:$0xff]
        %v1132 = vld [vmem:[%s1120 + $0x58] sm:$0xff]
        %v1133 = vld [vmem:[%s1120 + $0x60] sm:$0xff]
        %v1134 = vld [vmem:[%s1120 + $0x68] sm:$0xff]
        %v1135 = vld [vmem:[%s1120 + $0x70] sm:$0xff]
        %v1136 = vld [vmem:[%s1120 + $0x78] sm:$0xff]
        %v1137 = vld [vmem:[%s1120 + $0x80] sm:$0xff]
        %v1138 = vld [vmem:[%s1120 + $0x88] sm:$0xff]
        %v1139 = vld [vmem:[%s1120 + $0x90] sm:$0xff]
        %v1140 = vld [vmem:[%s1120 + $0x98] sm:$0xff]
        %v1141 = vld [vmem:[%s1120 + $0xa0] sm:$0xff]
        %v1142 = vld [vmem:[%s1120 + $0xa8] sm:$0xff]
        %v1143 = vld [vmem:[%s1120 + $0xb0] sm:$0xff]
        %v1144 = vld [vmem:[%s1120 + $0xb8] sm:$0xff]
        %v1145 = vld [vmem:[%s1120 + $0xc0] sm:$0xff]
        %v1146 = vld [vmem:[%s1120 + $0xc8] sm:$0xff]
        %v1147 = vld [vmem:[%s1120 + $0xd0] sm:$0xff]
        %v1148 = vld [vmem:[%s1120 + $0xd8] sm:$0xff]
        %v1149 = vld [vmem:[%s1120 + $0xe0] sm:$0xff]
        %v1150 = vld [vmem:[%s1120 + $0xe8] sm:$0xff]
        %v1151 = vld [vmem:[%s1120 + $0xf0] sm:$0xff]
        %v1152 = vld [vmem:[%s1120 + $0xf8] sm:$0xff]
        %vm1153 = vcmask 1045504
        %v1154 = vrot.slane %v406, 2
        %v1155 = vrot.slane %v407, 2
        %v1156 = vsel %vm1153, %v1154, %v1155
        %v1157 = vrot.slane %v408, 2
        %v1158 = vsel %vm1153, %v1155, %v1157
        %1161 = vmatprep.subr.mxu0 %v1152
        %1162 = vmatpush1.msra.mxu0 %v1151
        %1163 = vmatprep.subr.mxu0 %v1150
        %1164 = vmatpush1.msra.mxu0 %v1149
        %1165 = vmatprep.subr.mxu0 %v1148
        %1166 = vmatpush1.msra.mxu0 %v1147
        %1167 = vmatprep.subr.mxu0 %v1146
        %1168 = vmatpush1.msra.mxu0 %v1145
        %1169 = vmatprep.subr.mxu0 %v1144
        %1170 = vmatpush1.msra.mxu0 %v1143
        %1171 = vmatprep.subr.mxu0 %v1142
        %1172 = vmatpush1.msra.mxu0 %v1141
        %1173 = vmatprep.subr.mxu0 %v1140
        %1174 = vmatpush1.msra.mxu0 %v1139
        %1175 = vmatprep.subr.mxu0 %v1138
        %1176 = vmatpush1.msra.mxu0 %v1137
        %1177 = vmatprep.subr.mxu0 %v1136
        %1178 = vmatpush1.msra.mxu0 %v1135
        %1179 = vmatprep.subr.mxu0 %v1134
        %1180 = vmatpush1.msra.mxu0 %v1133
        %1181 = vmatprep.subr.mxu0 %v1132
        %1182 = vmatpush1.msra.mxu0 %v1131
        %1183 = vmatprep.subr.mxu0 %v1130
        %1184 = vmatpush1.msra.mxu0 %v1129
        %1185 = vmatprep.subr.mxu0 %v1128
        %1186 = vmatpush1.msra.mxu0 %v1127
        %1187 = vmatprep.subr.mxu0 %v1126
        %1188 = vmatpush1.msra.mxu0 %v1125
        %1189 = vmatprep.subr.mxu0 %v1124
        %1190 = vmatpush1.msra.mxu0 %v1123
        %1191 = vmatprep.subr.mxu0 %v1122
        %1192 = vmatpush1.msra.mxu0 %v1121
        %1193 = vmatprep.subr.mxu0 0.0
        %1194 = vmatpush2.msra.mxu0 0.0
        %1195 = vmatprep.subr.mxu0 0.0
        %1196 = vmatpush2.msra.mxu0 0.0
        %1197 = vmatprep.subr.mxu0 0.0
        %1198 = vmatpush2.msra.mxu0 0.0
        %1199 = vmatprep.subr.mxu0 0.0
        %1200 = vmatpush2.msra.mxu0 0.0
        %1201 = vmatprep.subr.mxu0 0.0
        %1202 = vmatpush2.msra.mxu0 0.0
        %1203 = vmatprep.subr.mxu0 0.0
        %1204 = vmatpush2.msra.mxu0 0.0
        %1205 = vmatprep.subr.mxu0 0.0
        %1206 = vmatpush2.msra.mxu0 0.0
        %1207 = vmatprep.subr.mxu0 0.0
        %1208 = vmatpush2.msra.mxu0 0.0
        %1209 = vmatprep.subr.mxu0 0.0
        %1210 = vmatpush2.msra.mxu0 0.0
        %1211 = vmatprep.subr.mxu0 0.0
        %1212 = vmatpush2.msra.mxu0 0.0
        %1213 = vmatprep.subr.mxu0 0.0
        %1214 = vmatpush2.msra.mxu0 0.0
        %1215 = vmatprep.subr.mxu0 0.0
        %1216 = vmatpush2.msra.mxu0 0.0
        %1217 = vmatprep.subr.mxu0 0.0
        %1218 = vmatpush2.msra.mxu0 0.0
        %1219 = vmatprep.subr.mxu0 0.0
        %1220 = vmatpush2.msra.mxu0 0.0
        %1221 = vmatprep.subr.mxu0 0.0
        %1222 = vmatpush2.msra.mxu0 0.0
        %1223 = vmatprep.subr.mxu0 0.0
        %1224 = vmatpush2.msra.mxu0 0.0
        %1225 = vmatprep.mubr.f32.mxu0 0.0
        %1226 = vmatmul.mubr.f32.gmra.mxu0 %v1156
        %v1227 = vpop.f32.mrf.mxu0
        %v1228 = vadd.f32 0.0, %v1227
        %v1229 = vpop.f32.mrf.mxu0
        %v1230 = vadd.f32 0.0, %v1229
        %1231 = vmatprep.mubr.f32.mxu0 0.0
        %1232 = vmatmul.mubr.f32.gmra.mxu0 %v1158
        %v1233 = vpop.f32.mrf.mxu0
        %v1234 = vadd.f32 0.0, %v1233
        %v1235 = vpop.f32.mrf.mxu0
        %v1236 = vadd.f32 0.0, %v1235
        %1237 = vdwg.mxu0
        %v1238 = vadd.f32 %v1116, %v1228
        %v1239 = vadd.f32 %v1117, %v1230
        %v1240 = vadd.f32 %v1118, %v1234
        %v1241 = vadd.f32 %v1119, %v1236
        %s1242 = scalar_lea.vmem [#allocation5], 1792
        %v1243 = vld [vmem:[%s1242] sm:$0xff]
        %v1244 = vld [vmem:[%s1242 + $0x8] sm:$0xff]
        %v1245 = vld [vmem:[%s1242 + $0x10] sm:$0xff]
        %v1246 = vld [vmem:[%s1242 + $0x18] sm:$0xff]
        %v1247 = vld [vmem:[%s1242 + $0x20] sm:$0xff]
        %v1248 = vld [vmem:[%s1242 + $0x28] sm:$0xff]
        %v1249 = vld [vmem:[%s1242 + $0x30] sm:$0xff]
        %v1250 = vld [vmem:[%s1242 + $0x38] sm:$0xff]
        %v1251 = vld [vmem:[%s1242 + $0x40] sm:$0xff]
        %v1252 = vld [vmem:[%s1242 + $0x48] sm:$0xff]
        %v1253 = vld [vmem:[%s1242 + $0x50] sm:$0xff]
        %v1254 = vld [vmem:[%s1242 + $0x58] sm:$0xff]
        %v1255 = vld [vmem:[%s1242 + $0x60] sm:$0xff]
        %v1256 = vld [vmem:[%s1242 + $0x68] sm:$0xff]
        %v1257 = vld [vmem:[%s1242 + $0x70] sm:$0xff]
        %v1258 = vld [vmem:[%s1242 + $0x78] sm:$0xff]
        %v1259 = vld [vmem:[%s1242 + $0x80] sm:$0xff]
        %v1260 = vld [vmem:[%s1242 + $0x88] sm:$0xff]
        %v1261 = vld [vmem:[%s1242 + $0x90] sm:$0xff]
        %v1262 = vld [vmem:[%s1242 + $0x98] sm:$0xff]
        %v1263 = vld [vmem:[%s1242 + $0xa0] sm:$0xff]
        %v1264 = vld [vmem:[%s1242 + $0xa8] sm:$0xff]
        %v1265 = vld [vmem:[%s1242 + $0xb0] sm:$0xff]
        %v1266 = vld [vmem:[%s1242 + $0xb8] sm:$0xff]
        %v1267 = vld [vmem:[%s1242 + $0xc0] sm:$0xff]
        %v1268 = vld [vmem:[%s1242 + $0xc8] sm:$0xff]
        %v1269 = vld [vmem:[%s1242 + $0xd0] sm:$0xff]
        %v1270 = vld [vmem:[%s1242 + $0xd8] sm:$0xff]
        %v1271 = vld [vmem:[%s1242 + $0xe0] sm:$0xff]
        %v1272 = vld [vmem:[%s1242 + $0xe8] sm:$0xff]
        %v1273 = vld [vmem:[%s1242 + $0xf0] sm:$0xff]
        %v1274 = vld [vmem:[%s1242 + $0xf8] sm:$0xff]
        %v1275 = vrot.slane %v408, 4
        %v1276 = vsel %vm477, %v481, %v1275
        %1278 = vmatprep.subr.mxu0 %v1274
        %1279 = vmatpush1.msra.mxu0 %v1273
        %1280 = vmatprep.subr.mxu0 %v1272
        %1281 = vmatpush1.msra.mxu0 %v1271
        %1282 = vmatprep.subr.mxu0 %v1270
        %1283 = vmatpush1.msra.mxu0 %v1269
        %1284 = vmatprep.subr.mxu0 %v1268
        %1285 = vmatpush1.msra.mxu0 %v1267
        %1286 = vmatprep.subr.mxu0 %v1266
        %1287 = vmatpush1.msra.mxu0 %v1265
        %1288 = vmatprep.subr.mxu0 %v1264
        %1289 = vmatpush1.msra.mxu0 %v1263
        %1290 = vmatprep.subr.mxu0 %v1262
        %1291 = vmatpush1.msra.mxu0 %v1261
        %1292 = vmatprep.subr.mxu0 %v1260
        %1293 = vmatpush1.msra.mxu0 %v1259
        %1294 = vmatprep.subr.mxu0 %v1258
        %1295 = vmatpush1.msra.mxu0 %v1257
        %1296 = vmatprep.subr.mxu0 %v1256
        %1297 = vmatpush1.msra.mxu0 %v1255
        %1298 = vmatprep.subr.mxu0 %v1254
        %1299 = vmatpush1.msra.mxu0 %v1253
        %1300 = vmatprep.subr.mxu0 %v1252
        %1301 = vmatpush1.msra.mxu0 %v1251
        %1302 = vmatprep.subr.mxu0 %v1250
        %1303 = vmatpush1.msra.mxu0 %v1249
        %1304 = vmatprep.subr.mxu0 %v1248
        %1305 = vmatpush1.msra.mxu0 %v1247
        %1306 = vmatprep.subr.mxu0 %v1246
        %1307 = vmatpush1.msra.mxu0 %v1245
        %1308 = vmatprep.subr.mxu0 %v1244
        %1309 = vmatpush1.msra.mxu0 %v1243
        %1310 = vmatprep.subr.mxu0 0.0
        %1311 = vmatpush2.msra.mxu0 0.0
        %1312 = vmatprep.subr.mxu0 0.0
        %1313 = vmatpush2.msra.mxu0 0.0
        %1314 = vmatprep.subr.mxu0 0.0
        %1315 = vmatpush2.msra.mxu0 0.0
        %1316 = vmatprep.subr.mxu0 0.0
        %1317 = vmatpush2.msra.mxu0 0.0
        %1318 = vmatprep.subr.mxu0 0.0
        %1319 = vmatpush2.msra.mxu0 0.0
        %1320 = vmatprep.subr.mxu0 0.0
        %1321 = vmatpush2.msra.mxu0 0.0
        %1322 = vmatprep.subr.mxu0 0.0
        %1323 = vmatpush2.msra.mxu0 0.0
        %1324 = vmatprep.subr.mxu0 0.0
        %1325 = vmatpush2.msra.mxu0 0.0
        %1326 = vmatprep.subr.mxu0 0.0
        %1327 = vmatpush2.msra.mxu0 0.0
        %1328 = vmatprep.subr.mxu0 0.0
        %1329 = vmatpush2.msra.mxu0 0.0
        %1330 = vmatprep.subr.mxu0 0.0
        %1331 = vmatpush2.msra.mxu0 0.0
        %1332 = vmatprep.subr.mxu0 0.0
        %1333 = vmatpush2.msra.mxu0 0.0
        %1334 = vmatprep.subr.mxu0 0.0
        %1335 = vmatpush2.msra.mxu0 0.0
        %1336 = vmatprep.subr.mxu0 0.0
        %1337 = vmatpush2.msra.mxu0 0.0
        %1338 = vmatprep.subr.mxu0 0.0
        %1339 = vmatpush2.msra.mxu0 0.0
        %1340 = vmatprep.subr.mxu0 0.0
        %1341 = vmatpush2.msra.mxu0 0.0
        %1342 = vmatprep.mubr.f32.mxu0 0.0
        %1343 = vmatmul.mubr.f32.gmra.mxu0 %v482
        %v1344 = vpop.f32.mrf.mxu0
        %v1345 = vadd.f32 0.0, %v1344
        %v1346 = vpop.f32.mrf.mxu0
        %v1347 = vadd.f32 0.0, %v1346
        %1348 = vmatprep.mubr.f32.mxu0 0.0
        %1349 = vmatmul.mubr.f32.gmra.mxu0 %v1276
        %v1350 = vpop.f32.mrf.mxu0
        %v1351 = vadd.f32 0.0, %v1350
        %v1352 = vpop.f32.mrf.mxu0
        %v1353 = vadd.f32 0.0, %v1352
        %1354 = vdwg.mxu0
        %v1355 = vadd.f32 %v1238, %v1345
        %v1356 = vadd.f32 %v1239, %v1347
        %v1357 = vadd.f32 %v1240, %v1351
        %v1358 = vadd.f32 %v1241, %v1353
        %s1359 = scalar_lea.vmem [#allocation5], 2048
        %v1360 = vld [vmem:[%s1359] sm:$0xff]
        %v1361 = vld [vmem:[%s1359 + $0x8] sm:$0xff]
        %v1362 = vld [vmem:[%s1359 + $0x10] sm:$0xff]
        %v1363 = vld [vmem:[%s1359 + $0x18] sm:$0xff]
        %v1364 = vld [vmem:[%s1359 + $0x20] sm:$0xff]
        %v1365 = vld [vmem:[%s1359 + $0x28] sm:$0xff]
        %v1366 = vld [vmem:[%s1359 + $0x30] sm:$0xff]
        %v1367 = vld [vmem:[%s1359 + $0x38] sm:$0xff]
        %v1368 = vld [vmem:[%s1359 + $0x40] sm:$0xff]
        %v1369 = vld [vmem:[%s1359 + $0x48] sm:$0xff]
        %v1370 = vld [vmem:[%s1359 + $0x50] sm:$0xff]
        %v1371 = vld [vmem:[%s1359 + $0x58] sm:$0xff]
        %v1372 = vld [vmem:[%s1359 + $0x60] sm:$0xff]
        %v1373 = vld [vmem:[%s1359 + $0x68] sm:$0xff]
        %v1374 = vld [vmem:[%s1359 + $0x70] sm:$0xff]
        %v1375 = vld [vmem:[%s1359 + $0x78] sm:$0xff]
        %v1376 = vld [vmem:[%s1359 + $0x80] sm:$0xff]
        %v1377 = vld [vmem:[%s1359 + $0x88] sm:$0xff]
        %v1378 = vld [vmem:[%s1359 + $0x90] sm:$0xff]
        %v1379 = vld [vmem:[%s1359 + $0x98] sm:$0xff]
        %v1380 = vld [vmem:[%s1359 + $0xa0] sm:$0xff]
        %v1381 = vld [vmem:[%s1359 + $0xa8] sm:$0xff]
        %v1382 = vld [vmem:[%s1359 + $0xb0] sm:$0xff]
        %v1383 = vld [vmem:[%s1359 + $0xb8] sm:$0xff]
        %v1384 = vld [vmem:[%s1359 + $0xc0] sm:$0xff]
        %v1385 = vld [vmem:[%s1359 + $0xc8] sm:$0xff]
        %v1386 = vld [vmem:[%s1359 + $0xd0] sm:$0xff]
        %v1387 = vld [vmem:[%s1359 + $0xd8] sm:$0xff]
        %v1388 = vld [vmem:[%s1359 + $0xe0] sm:$0xff]
        %v1389 = vld [vmem:[%s1359 + $0xe8] sm:$0xff]
        %v1390 = vld [vmem:[%s1359 + $0xf0] sm:$0xff]
        %v1391 = vld [vmem:[%s1359 + $0xf8] sm:$0xff]
        %1392 = vmatprep.subr.mxu0 %v1391
        %1393 = vmatpush1.msra.mxu0 %v1390
        %1394 = vmatprep.subr.mxu0 %v1389
        %1395 = vmatpush1.msra.mxu0 %v1388
        %1396 = vmatprep.subr.mxu0 %v1387
        %1397 = vmatpush1.msra.mxu0 %v1386
        %1398 = vmatprep.subr.mxu0 %v1385
        %1399 = vmatpush1.msra.mxu0 %v1384
        %1400 = vmatprep.subr.mxu0 %v1383
        %1401 = vmatpush1.msra.mxu0 %v1382
        %1402 = vmatprep.subr.mxu0 %v1381
        %1403 = vmatpush1.msra.mxu0 %v1380
        %1404 = vmatprep.subr.mxu0 %v1379
        %1405 = vmatpush1.msra.mxu0 %v1378
        %1406 = vmatprep.subr.mxu0 %v1377
        %1407 = vmatpush1.msra.mxu0 %v1376
        %1408 = vmatprep.subr.mxu0 %v1375
        %1409 = vmatpush1.msra.mxu0 %v1374
        %1410 = vmatprep.subr.mxu0 %v1373
        %1411 = vmatpush1.msra.mxu0 %v1372
        %1412 = vmatprep.subr.mxu0 %v1371
        %1413 = vmatpush1.msra.mxu0 %v1370
        %1414 = vmatprep.subr.mxu0 %v1369
        %1415 = vmatpush1.msra.mxu0 %v1368
        %1416 = vmatprep.subr.mxu0 %v1367
        %1417 = vmatpush1.msra.mxu0 %v1366
        %1418 = vmatprep.subr.mxu0 %v1365
        %1419 = vmatpush1.msra.mxu0 %v1364
        %1420 = vmatprep.subr.mxu0 %v1363
        %1421 = vmatpush1.msra.mxu0 %v1362
        %1422 = vmatprep.subr.mxu0 %v1361
        %1423 = vmatpush1.msra.mxu0 %v1360
        %1424 = vmatprep.subr.mxu0 0.0
        %1425 = vmatpush2.msra.mxu0 0.0
        %1426 = vmatprep.subr.mxu0 0.0
        %1427 = vmatpush2.msra.mxu0 0.0
        %1428 = vmatprep.subr.mxu0 0.0
        %1429 = vmatpush2.msra.mxu0 0.0
        %1430 = vmatprep.subr.mxu0 0.0
        %1431 = vmatpush2.msra.mxu0 0.0
        %1432 = vmatprep.subr.mxu0 0.0
        %1433 = vmatpush2.msra.mxu0 0.0
        %1434 = vmatprep.subr.mxu0 0.0
        %1435 = vmatpush2.msra.mxu0 0.0
        %1436 = vmatprep.subr.mxu0 0.0
        %1437 = vmatpush2.msra.mxu0 0.0
        %1438 = vmatprep.subr.mxu0 0.0
        %1439 = vmatpush2.msra.mxu0 0.0
        %1440 = vmatprep.subr.mxu0 0.0
        %1441 = vmatpush2.msra.mxu0 0.0
        %1442 = vmatprep.subr.mxu0 0.0
        %1443 = vmatpush2.msra.mxu0 0.0
        %1444 = vmatprep.subr.mxu0 0.0
        %1445 = vmatpush2.msra.mxu0 0.0
        %1446 = vmatprep.subr.mxu0 0.0
        %1447 = vmatpush2.msra.mxu0 0.0
        %1448 = vmatprep.subr.mxu0 0.0
        %1449 = vmatpush2.msra.mxu0 0.0
        %1450 = vmatprep.subr.mxu0 0.0
        %1451 = vmatpush2.msra.mxu0 0.0
        %1452 = vmatprep.subr.mxu0 0.0
        %1453 = vmatpush2.msra.mxu0 0.0
        %1454 = vmatprep.subr.mxu0 0.0
        %1455 = vmatpush2.msra.mxu0 0.0
        %1456 = vmatprep.mubr.f32.mxu0 0.0
        %1457 = vmatmul.mubr.f32.gmra.mxu0 %v407
        %v1458 = vpop.f32.mrf.mxu0
        %v1459 = vadd.f32 0.0, %v1458
        %v1460 = vpop.f32.mrf.mxu0
        %v1461 = vadd.f32 0.0, %v1460
        %1462 = vmatprep.mubr.f32.mxu0 0.0
        %1463 = vmatmul.mubr.f32.gmra.mxu0 %v408
        %v1464 = vpop.f32.mrf.mxu0
        %v1465 = vadd.f32 0.0, %v1464
        %v1466 = vpop.f32.mrf.mxu0
        %v1467 = vadd.f32 0.0, %v1466
        %1468 = vdwg.mxu0
        %v1469 = vadd.f32 %v1355, %v1459
        %v1470 = vadd.f32 %v1356, %v1461
        %v1471 = vadd.f32 %v1357, %v1465
        %v1472 = vadd.f32 %v1358, %v1467
        %v1473 = vld [vmem:[%s2] sm:$0xff]
        %v1474 = vld [vmem:[%s2 + $0x8] sm:$0xff]
        %v1475 = vld [vmem:[%s2 + $0x10] sm:$0xff]
        %v1476 = vld [vmem:[%s2 + $0x18] sm:$0xff]
        %v1477 = vld [vmem:[%s2 + $0x20] sm:$0xff]
        %v1478 = vld [vmem:[%s2 + $0x28] sm:$0xff]
        %v1479 = vld [vmem:[%s2 + $0x30] sm:$0xff]
        %v1480 = vld [vmem:[%s2 + $0x38] sm:$0xff]
        %v1481 = vld [vmem:[%s2 + $0x40] sm:$0xff]
        %v1482 = vld [vmem:[%s2 + $0x48] sm:$0xff]
        %v1483 = vld [vmem:[%s2 + $0x50] sm:$0xff]
        %v1484 = vld [vmem:[%s2 + $0x58] sm:$0xff]
        %v1485 = vld [vmem:[%s2 + $0x60] sm:$0xff]
        %v1486 = vld [vmem:[%s2 + $0x68] sm:$0xff]
        %v1487 = vld [vmem:[%s2 + $0x70] sm:$0xff]
        %v1488 = vld [vmem:[%s2 + $0x78] sm:$0xff]
        %v1489 = vld [vmem:[%s2 + $0x80] sm:$0xff]
        %v1490 = vld [vmem:[%s2 + $0x88] sm:$0xff]
        %v1491 = vld [vmem:[%s2 + $0x90] sm:$0xff]
        %v1492 = vld [vmem:[%s2 + $0x98] sm:$0xff]
        %v1493 = vld [vmem:[%s2 + $0xa0] sm:$0xff]
        %v1494 = vld [vmem:[%s2 + $0xa8] sm:$0xff]
        %v1495 = vld [vmem:[%s2 + $0xb0] sm:$0xff]
        %v1496 = vld [vmem:[%s2 + $0xb8] sm:$0xff]
        %v1497 = vld [vmem:[%s2 + $0xc0] sm:$0xff]
        %v1498 = vld [vmem:[%s2 + $0xc8] sm:$0xff]
        %v1499 = vld [vmem:[%s2 + $0xd0] sm:$0xff]
        %v1500 = vld [vmem:[%s2 + $0xd8] sm:$0xff]
        %v1501 = vld [vmem:[%s2 + $0xe0] sm:$0xff]
        %v1502 = vld [vmem:[%s2 + $0xe8] sm:$0xff]
        %v1503 = vld [vmem:[%s2 + $0xf0] sm:$0xff]
        %v1504 = vld [vmem:[%s2 + $0xf8] sm:$0xff]
        %1505 = vmatprep.subr.mxu0 0.0
        %1506 = vmatpush1.msra.mxu0 %v1488
        %1507 = vmatprep.subr.mxu0 0.0
        %1508 = vmatpush1.msra.mxu0 %v1487
        %1509 = vmatprep.subr.mxu0 0.0
        %1510 = vmatpush1.msra.mxu0 %v1486
        %1511 = vmatprep.subr.mxu0 0.0
        %1512 = vmatpush1.msra.mxu0 %v1485
        %1513 = vmatprep.subr.mxu0 0.0
        %1514 = vmatpush1.msra.mxu0 %v1484
        %1515 = vmatprep.subr.mxu0 0.0
        %1516 = vmatpush1.msra.mxu0 %v1483
        %1517 = vmatprep.subr.mxu0 0.0
        %1518 = vmatpush1.msra.mxu0 %v1482
        %1519 = vmatprep.subr.mxu0 0.0
        %1520 = vmatpush1.msra.mxu0 %v1481
        %1521 = vmatprep.subr.mxu0 0.0
        %1522 = vmatpush1.msra.mxu0 %v1480
        %1523 = vmatprep.subr.mxu0 0.0
        %1524 = vmatpush1.msra.mxu0 %v1479
        %1525 = vmatprep.subr.mxu0 0.0
        %1526 = vmatpush1.msra.mxu0 %v1478
        %1527 = vmatprep.subr.mxu0 0.0
        %1528 = vmatpush1.msra.mxu0 %v1477
        %1529 = vmatprep.subr.mxu0 0.0
        %1530 = vmatpush1.msra.mxu0 %v1476
        %1531 = vmatprep.subr.mxu0 0.0
        %1532 = vmatpush1.msra.mxu0 %v1475
        %1533 = vmatprep.subr.mxu0 0.0
        %1534 = vmatpush1.msra.mxu0 %v1474
        %1535 = vmatprep.subr.mxu0 0.0
        %1536 = vmatpush1.msra.mxu0 %v1473
        %1537 = vmatprep.subr.mxu0 0.0
        %1538 = vmatpush2.msra.mxu0 %v1504
        %1539 = vmatprep.subr.mxu0 0.0
        %1540 = vmatpush2.msra.mxu0 %v1503
        %1541 = vmatprep.subr.mxu0 0.0
        %1542 = vmatpush2.msra.mxu0 %v1502
        %1543 = vmatprep.subr.mxu0 0.0
        %1544 = vmatpush2.msra.mxu0 %v1501
        %1545 = vmatprep.subr.mxu0 0.0
        %1546 = vmatpush2.msra.mxu0 %v1500
        %1547 = vmatprep.subr.mxu0 0.0
        %1548 = vmatpush2.msra.mxu0 %v1499
        %1549 = vmatprep.subr.mxu0 0.0
        %1550 = vmatpush2.msra.mxu0 %v1498
        %1551 = vmatprep.subr.mxu0 0.0
        %1552 = vmatpush2.msra.mxu0 %v1497
        %1553 = vmatprep.subr.mxu0 0.0
        %1554 = vmatpush2.msra.mxu0 %v1496
        %1555 = vmatprep.subr.mxu0 0.0
        %1556 = vmatpush2.msra.mxu0 %v1495
        %1557 = vmatprep.subr.mxu0 0.0
        %1558 = vmatpush2.msra.mxu0 %v1494
        %1559 = vmatprep.subr.mxu0 0.0
        %1560 = vmatpush2.msra.mxu0 %v1493
        %1561 = vmatprep.subr.mxu0 0.0
        %1562 = vmatpush2.msra.mxu0 %v1492
        %1563 = vmatprep.subr.mxu0 0.0
        %1564 = vmatpush2.msra.mxu0 %v1491
        %1565 = vmatprep.subr.mxu0 0.0
        %1566 = vmatpush2.msra.mxu0 %v1490
        %1567 = vmatprep.subr.mxu0 0.0
        %1568 = vmatpush2.msra.mxu0 %v1489
        %1569 = vmatprep.mubr.f32.mxu0 %v1470
        %1570 = vmatmul.mubr.f32.gmra.mxu0 %v1469
        %v1571 = vpop.f32.mrf.mxu0
        %v1572 = vadd.f32 0.0, %v1571
        %v1573 = vpop.f32.mrf.mxu0
        %1574 = vmatprep.mubr.f32.mxu0 %v1472
        %1575 = vmatmul.mubr.f32.gmra.mxu0 %v1471
        %v1576 = vpop.f32.mrf.mxu0
        %v1577 = vadd.f32 0.0, %v1576
        %v1578 = vpop.f32.mrf.mxu0
        %1579 = vdwg.mxu0
        %v1580 = vxor.u32 %v1572, 2147483648
        %v1581 = vxor.u32 %v1577, 2147483648
        %v1582 = vmul.f32 %v1580, 1.442695
        %v1583 = vpow.pop %v1582
        %v1584 = vmul.f32 %v1581, 1.442695
        %v1585 = vpow.pop %v1584
        %v1586 = vadd.f32 %v1583, 1.0
        %v1587 = vadd.f32 %v1585, 1.0
        %v1588 = vrcp.pop %v1586
        %v1589 = vmul.f32 1.0, %v1588
        %v1590 = vrcp.pop %v1587
        %v1591 = vmul.f32 1.0, %v1590
        %v1592 = vld [vmem:[#allocation7] sm:$0xff]
        %v1593 = vld [vmem:[#allocation7 + $0x8] sm:$0xff]
        %v1594 = vld [vmem:[#allocation7 + $0x10] sm:$0xff]
        %v1595 = vld [vmem:[#allocation7 + $0x18] sm:$0xff]
        %v1596 = vld [vmem:[#allocation7 + $0x20] sm:$0xff]
        %v1597 = vld [vmem:[#allocation7 + $0x28] sm:$0xff]
        %v1598 = vld [vmem:[#allocation7 + $0x30] sm:$0xff]
        %v1599 = vld [vmem:[#allocation7 + $0x38] sm:$0xff]
        %v1600 = vld [vmem:[#allocation7 + $0x40] sm:$0xff]
        %v1601 = vld [vmem:[#allocation7 + $0x48] sm:$0xff]
        %v1602 = vld [vmem:[#allocation7 + $0x50] sm:$0xff]
        %v1603 = vld [vmem:[#allocation7 + $0x58] sm:$0xff]
        %v1604 = vld [vmem:[#allocation7 + $0x60] sm:$0xff]
        %v1605 = vld [vmem:[#allocation7 + $0x68] sm:$0xff]
        %v1606 = vld [vmem:[#allocation7 + $0x70] sm:$0xff]
        %v1607 = vld [vmem:[#allocation7 + $0x78] sm:$0xff]
        %vm1608 = vcmask 523264
        %v1610 = vsel %vm1608, %v1589, 0
        %v1613 = vsel %vm1608, %v1591, 0
        %1615 = vmatprep.subr.mxu0 0.0
        %1616 = vmatpush1.msra.mxu0 0.0
        %1617 = vmatprep.subr.mxu0 0.0
        %1618 = vmatpush1.msra.mxu0 0.0
        %1619 = vmatprep.subr.mxu0 0.0
        %1620 = vmatpush1.msra.mxu0 0.0
        %1621 = vmatprep.subr.mxu0 0.0
        %1622 = vmatpush1.msra.mxu0 0.0
        %1623 = vmatprep.subr.mxu0 0.0
        %1624 = vmatpush1.msra.mxu0 0.0
        %1625 = vmatprep.subr.mxu0 0.0
        %1626 = vmatpush1.msra.mxu0 0.0
        %1627 = vmatprep.subr.mxu0 0.0
        %1628 = vmatpush1.msra.mxu0 0.0
        %1629 = vmatprep.subr.mxu0 0.0
        %1630 = vmatpush1.msra.mxu0 0.0
        %1631 = vmatprep.subr.mxu0 %v1607
        %1632 = vmatpush1.msra.mxu0 %v1606
        %1633 = vmatprep.subr.mxu0 %v1605
        %1634 = vmatpush1.msra.mxu0 %v1604
        %1635 = vmatprep.subr.mxu0 %v1603
        %1636 = vmatpush1.msra.mxu0 %v1602
        %1637 = vmatprep.subr.mxu0 %v1601
        %1638 = vmatpush1.msra.mxu0 %v1600
        %1639 = vmatprep.subr.mxu0 %v1599
        %1640 = vmatpush1.msra.mxu0 %v1598
        %1641 = vmatprep.subr.mxu0 %v1597
        %1642 = vmatpush1.msra.mxu0 %v1596
        %1643 = vmatprep.subr.mxu0 %v1595
        %1644 = vmatpush1.msra.mxu0 %v1594
        %1645 = vmatprep.subr.mxu0 %v1593
        %1646 = vmatpush1.msra.mxu0 %v1592
        %1647 = vmatprep.subr.mxu0 0.0
        %1648 = vmatpush2.msra.mxu0 0.0
        %1649 = vmatprep.subr.mxu0 0.0
        %1650 = vmatpush2.msra.mxu0 0.0
        %1651 = vmatprep.subr.mxu0 0.0
        %1652 = vmatpush2.msra.mxu0 0.0
        %1653 = vmatprep.subr.mxu0 0.0
        %1654 = vmatpush2.msra.mxu0 0.0
        %1655 = vmatprep.subr.mxu0 0.0
        %1656 = vmatpush2.msra.mxu0 0.0
        %1657 = vmatprep.subr.mxu0 0.0
        %1658 = vmatpush2.msra.mxu0 0.0
        %1659 = vmatprep.subr.mxu0 0.0
        %1660 = vmatpush2.msra.mxu0 0.0
        %1661 = vmatprep.subr.mxu0 0.0
        %1662 = vmatpush2.msra.mxu0 0.0
        %1663 = vmatprep.subr.mxu0 0.0
        %1664 = vmatpush2.msra.mxu0 0.0
        %1665 = vmatprep.subr.mxu0 0.0
        %1666 = vmatpush2.msra.mxu0 0.0
        %1667 = vmatprep.subr.mxu0 0.0
        %1668 = vmatpush2.msra.mxu0 0.0
        %1669 = vmatprep.subr.mxu0 0.0
        %1670 = vmatpush2.msra.mxu0 0.0
        %1671 = vmatprep.subr.mxu0 0.0
        %1672 = vmatpush2.msra.mxu0 0.0
        %1673 = vmatprep.subr.mxu0 0.0
        %1674 = vmatpush2.msra.mxu0 0.0
        %1675 = vmatprep.subr.mxu0 0.0
        %1676 = vmatpush2.msra.mxu0 0.0
        %1677 = vmatprep.subr.mxu0 0.0
        %1678 = vmatpush2.msra.mxu0 0.0
        %1679 = vmatprep.mubr.f32.mxu0 0.0
        %1680 = vmatmul.mubr.f32.gmra.mxu0 %v1610
        %v1681 = vpop.f32.mrf.mxu0
        %v1682 = vadd.f32 1.0, %v1681
        %v1683 = vpop.f32.mrf.mxu0
        %v1684 = vadd.f32 1.0, %v1683
        %1685 = vmatprep.mubr.f32.mxu0 0.0
        %1686 = vmatmul.mubr.f32.gmra.mxu0 %v1613
        %v1687 = vpop.f32.mrf.mxu0
        %v1688 = vadd.f32 1.0, %v1687
        %v1689 = vpop.f32.mrf.mxu0
        %v1690 = vadd.f32 1.0, %v1689
        %1691 = vdwg.mxu0
        %v1692 = vmul.f32 %v1469, %v1682
        %v1693 = vmul.f32 %v1470, %v1684
        %v1694 = vmul.f32 %v1471, %v1688
        %v1695 = vmul.f32 %v1472, %v1690
        %v1696 = vld [vmem:[#allocation8] sm:$0xff]
        %v1697 = vld [vmem:[#allocation8 + $0x8] sm:$0xff]
        %v1698 = vld [vmem:[#allocation8 + $0x10] sm:$0xff]
        %v1699 = vld [vmem:[#allocation8 + $0x18] sm:$0xff]
        %v1700 = vld [vmem:[#allocation8 + $0x20] sm:$0xff]
        %v1701 = vld [vmem:[#allocation8 + $0x28] sm:$0xff]
        %v1702 = vld [vmem:[#allocation8 + $0x30] sm:$0xff]
        %v1703 = vld [vmem:[#allocation8 + $0x38] sm:$0xff]
        %v1704 = vld [vmem:[#allocation8 + $0x40] sm:$0xff]
        %v1705 = vld [vmem:[#allocation8 + $0x48] sm:$0xff]
        %v1706 = vld [vmem:[#allocation8 + $0x50] sm:$0xff]
        %v1707 = vld [vmem:[#allocation8 + $0x58] sm:$0xff]
        %v1708 = vld [vmem:[#allocation8 + $0x60] sm:$0xff]
        %v1709 = vld [vmem:[#allocation8 + $0x68] sm:$0xff]
        %v1710 = vld [vmem:[#allocation8 + $0x70] sm:$0xff]
        %v1711 = vld [vmem:[#allocation8 + $0x78] sm:$0xff]
        %v1712 = vld [vmem:[#allocation8 + $0x80] sm:$0xff]
        %v1713 = vld [vmem:[#allocation8 + $0x88] sm:$0xff]
        %v1714 = vld [vmem:[#allocation8 + $0x90] sm:$0xff]
        %v1715 = vld [vmem:[#allocation8 + $0x98] sm:$0xff]
        %v1716 = vld [vmem:[#allocation8 + $0xa0] sm:$0xff]
        %v1717 = vld [vmem:[#allocation8 + $0xa8] sm:$0xff]
        %v1718 = vld [vmem:[#allocation8 + $0xb0] sm:$0xff]
        %v1719 = vld [vmem:[#allocation8 + $0xb8] sm:$0xff]
        %v1720 = vld [vmem:[#allocation8 + $0xc0] sm:$0xff]
        %v1721 = vld [vmem:[#allocation8 + $0xc8] sm:$0xff]
        %v1722 = vld [vmem:[#allocation8 + $0xd0] sm:$0xff]
        %v1723 = vld [vmem:[#allocation8 + $0xd8] sm:$0xff]
        %v1724 = vld [vmem:[#allocation8 + $0xe0] sm:$0xff]
        %v1725 = vld [vmem:[#allocation8 + $0xe8] sm:$0xff]
        %v1726 = vld [vmem:[#allocation8 + $0xf0] sm:$0xff]
        %v1727 = vld [vmem:[#allocation8 + $0xf8] sm:$0xff]
        %v1728 = vld [vmem:[#allocation8 + $0x100] sm:$0xff]
        %v1729 = vld [vmem:[#allocation8 + $0x108] sm:$0xff]
        %v1730 = vld [vmem:[#allocation8 + $0x110] sm:$0xff]
        %v1731 = vld [vmem:[#allocation8 + $0x118] sm:$0xff]
        %v1732 = vld [vmem:[#allocation8 + $0x120] sm:$0xff]
        %v1733 = vld [vmem:[#allocation8 + $0x128] sm:$0xff]
        %v1734 = vld [vmem:[#allocation8 + $0x130] sm:$0xff]
        %v1735 = vld [vmem:[#allocation8 + $0x138] sm:$0xff]
        %v1736 = vld [vmem:[#allocation8 + $0x140] sm:$0xff]
        %v1737 = vld [vmem:[#allocation8 + $0x148] sm:$0xff]
        %v1738 = vld [vmem:[#allocation8 + $0x150] sm:$0xff]
        %v1739 = vld [vmem:[#allocation8 + $0x158] sm:$0xff]
        %v1740 = vld [vmem:[#allocation8 + $0x160] sm:$0xff]
        %v1741 = vld [vmem:[#allocation8 + $0x168] sm:$0xff]
        %v1742 = vld [vmem:[#allocation8 + $0x170] sm:$0xff]
        %v1743 = vld [vmem:[#allocation8 + $0x178] sm:$0xff]
        %v1744 = vld [vmem:[#allocation8 + $0x180] sm:$0xff]
        %v1745 = vld [vmem:[#allocation8 + $0x188] sm:$0xff]
        %v1746 = vld [vmem:[#allocation8 + $0x190] sm:$0xff]
        %v1747 = vld [vmem:[#allocation8 + $0x198] sm:$0xff]
        %v1748 = vld [vmem:[#allocation8 + $0x1a0] sm:$0xff]
        %v1749 = vld [vmem:[#allocation8 + $0x1a8] sm:$0xff]
        %v1750 = vld [vmem:[#allocation8 + $0x1b0] sm:$0xff]
        %v1751 = vld [vmem:[#allocation8 + $0x1b8] sm:$0xff]
        %v1752 = vld [vmem:[#allocation8 + $0x1c0] sm:$0xff]
        %v1753 = vld [vmem:[#allocation8 + $0x1c8] sm:$0xff]
        %v1754 = vld [vmem:[#allocation8 + $0x1d0] sm:$0xff]
        %v1755 = vld [vmem:[#allocation8 + $0x1d8] sm:$0xff]
        %v1756 = vld [vmem:[#allocation8 + $0x1e0] sm:$0xff]
        %v1757 = vld [vmem:[#allocation8 + $0x1e8] sm:$0xff]
        %v1758 = vld [vmem:[#allocation8 + $0x1f0] sm:$0xff]
        %v1759 = vld [vmem:[#allocation8 + $0x1f8] sm:$0xff]
        %1760 = vmatprep.subr.mxu0 %v1727
        %1761 = vmatpush1.msra.mxu0 %v1726
        %1762 = vmatprep.subr.mxu0 %v1725
        %1763 = vmatpush1.msra.mxu0 %v1724
        %1764 = vmatprep.subr.mxu0 %v1723
        %1765 = vmatpush1.msra.mxu0 %v1722
        %1766 = vmatprep.subr.mxu0 %v1721
        %1767 = vmatpush1.msra.mxu0 %v1720
        %1768 = vmatprep.subr.mxu0 %v1719
        %1769 = vmatpush1.msra.mxu0 %v1718
        %1770 = vmatprep.subr.mxu0 %v1717
        %1771 = vmatpush1.msra.mxu0 %v1716
        %1772 = vmatprep.subr.mxu0 %v1715
        %1773 = vmatpush1.msra.mxu0 %v1714
        %1774 = vmatprep.subr.mxu0 %v1713
        %1775 = vmatpush1.msra.mxu0 %v1712
        %1776 = vmatprep.subr.mxu0 %v1711
        %1777 = vmatpush1.msra.mxu0 %v1710
        %1778 = vmatprep.subr.mxu0 %v1709
        %1779 = vmatpush1.msra.mxu0 %v1708
        %1780 = vmatprep.subr.mxu0 %v1707
        %1781 = vmatpush1.msra.mxu0 %v1706
        %1782 = vmatprep.subr.mxu0 %v1705
        %1783 = vmatpush1.msra.mxu0 %v1704
        %1784 = vmatprep.subr.mxu0 %v1703
        %1785 = vmatpush1.msra.mxu0 %v1702
        %1786 = vmatprep.subr.mxu0 %v1701
        %1787 = vmatpush1.msra.mxu0 %v1700
        %1788 = vmatprep.subr.mxu0 %v1699
        %1789 = vmatpush1.msra.mxu0 %v1698
        %1790 = vmatprep.subr.mxu0 %v1697
        %1791 = vmatpush1.msra.mxu0 %v1696
        %1792 = vmatprep.subr.mxu0 %v1759
        %1793 = vmatpush2.msra.mxu0 %v1758
        %1794 = vmatprep.subr.mxu0 %v1757
        %1795 = vmatpush2.msra.mxu0 %v1756
        %1796 = vmatprep.subr.mxu0 %v1755
        %1797 = vmatpush2.msra.mxu0 %v1754
        %1798 = vmatprep.subr.mxu0 %v1753
        %1799 = vmatpush2.msra.mxu0 %v1752
        %1800 = vmatprep.subr.mxu0 %v1751
        %1801 = vmatpush2.msra.mxu0 %v1750
        %1802 = vmatprep.subr.mxu0 %v1749
        %1803 = vmatpush2.msra.mxu0 %v1748
        %1804 = vmatprep.subr.mxu0 %v1747
        %1805 = vmatpush2.msra.mxu0 %v1746
        %1806 = vmatprep.subr.mxu0 %v1745
        %1807 = vmatpush2.msra.mxu0 %v1744
        %1808 = vmatprep.subr.mxu0 %v1743
        %1809 = vmatpush2.msra.mxu0 %v1742
        %1810 = vmatprep.subr.mxu0 %v1741
        %1811 = vmatpush2.msra.mxu0 %v1740
        %1812 = vmatprep.subr.mxu0 %v1739
        %1813 = vmatpush2.msra.mxu0 %v1738
        %1814 = vmatprep.subr.mxu0 %v1737
        %1815 = vmatpush2.msra.mxu0 %v1736
        %1816 = vmatprep.subr.mxu0 %v1735
        %1817 = vmatpush2.msra.mxu0 %v1734
        %1818 = vmatprep.subr.mxu0 %v1733
        %1819 = vmatpush2.msra.mxu0 %v1732
        %1820 = vmatprep.subr.mxu0 %v1731
        %1821 = vmatpush2.msra.mxu0 %v1730
        %1822 = vmatprep.subr.mxu0 %v1729
        %1823 = vmatpush2.msra.mxu0 %v1728
        %1824 = vmatprep.mubr.f32.mxu0 %v1693
        %1825 = vmatmul.mubr.f32.gmra.mxu0 %v1692
        %v1826 = vpop.f32.mrf.mxu0
        %v1827 = vadd.f32 0.0, %v1826
        %v1828 = vpop.f32.mrf.mxu0
        %v1829 = vadd.f32 0.0, %v1828
        %1830 = vmatprep.mubr.f32.mxu0 %v1695
        %1831 = vmatmul.mubr.f32.gmra.mxu0 %v1694
        %v1832 = vpop.f32.mrf.mxu0
        %v1833 = vadd.f32 0.0, %v1832
        %v1834 = vpop.f32.mrf.mxu0
        %v1835 = vadd.f32 0.0, %v1834
        %1836 = vdwg.mxu0
        %v1837 = vld [vmem:[#allocation10] sm:$0x3]
        %v1839 = vlaneseq
        %v1840 = vshrl.u32 %v1839, 7
        %v1841 = vsub.s32 0, %v1840
        %v1842 = vrot.slane %v1837, %v1841
        %v1843 = vlaneseq
        %v1844 = vshrl.u32 %v1843, 7
        %v1845 = vsub.s32 1, %v1844
        %v1846 = vrot.slane %v1837, %v1845
        %v1849 = vmul.f32 %v1827, %v1842
        %v1850 = vmul.f32 %v1829, %v1846
        %v1851 = vmul.f32 %v1833, %v1842
        %v1852 = vmul.f32 %v1835, %v1846
        %v1853 = vld [vmem:[#allocation11] sm:$0x3]
        %v1855 = vlaneseq
        %v1856 = vshrl.u32 %v1855, 7
        %v1857 = vsub.s32 0, %v1856
        %v1858 = vrot.slane %v1853, %v1857
        %v1859 = vlaneseq
        %v1860 = vshrl.u32 %v1859, 7
        %v1861 = vsub.s32 1, %v1860
        %v1862 = vrot.slane %v1853, %v1861
        %v1865 = vadd.f32 %v1849, %v1858
        %v1866 = vadd.f32 %v1850, %v1862
        %v1867 = vadd.f32 %v1851, %v1858
        %v1868 = vadd.f32 %v1852, %v1862
        %vm1869 = vcmp.ge.f32.partialorder %v1865, 0.0
        %vm1870 = vcmp.ge.f32.partialorder %v1866, 0.0
        %vm1871 = vcmp.ge.f32.partialorder %v1867, 0.0
        %vm1872 = vcmp.ge.f32.partialorder %v1868, 0.0
        %v1873 = vld [vmem:[#allocation13] sm:$0x3]
        %v1875 = vlaneseq
        %v1876 = vshrl.u32 %v1875, 7
        %v1877 = vsub.s32 0, %v1876
        %v1878 = vrot.slane %v1873, %v1877
        %v1879 = vlaneseq
        %v1880 = vshrl.u32 %v1879, 7
        %v1881 = vsub.s32 1, %v1880
        %v1882 = vrot.slane %v1873, %v1881
        %v1885 = vmul.f32 %v1865, %v1878
        %v1886 = vmul.f32 %v1866, %v1882
        %v1887 = vmul.f32 %v1867, %v1878
        %v1888 = vmul.f32 %v1868, %v1882
        %v1889 = vsel %vm1869, %v1865, %v1885
        %v1890 = vsel %vm1870, %v1866, %v1886
        %v1891 = vsel %vm1871, %v1867, %v1887
        %v1892 = vsel %vm1872, %v1868, %v1888
        %1893 = vst [vmem:[%s404] sm:$0xff] %v1889
        %1894 = vst [vmem:[%s404 + $0x8] sm:$0xff] %v1890
        %1895 = vst [vmem:[%s404 + $0x10] sm:$0xff] %v1891
        %1896 = vst [vmem:[%s404 + $0x18] sm:$0xff] %v1892
        %s1897 = sand.u32 %s209, 1
        %s1898 = scalar_lea.sflag [#allocation4], %s1897
        %s1899 = sand.u32 %s209, 1
        %s1900 = smul.addr %s1899, 32
        %s1901 = scalar_lea.vmem [#allocation14], %s1900
        // Predicated region
        $region81: #{tpu_custom_call.1} parent=51 // pred_check
          %p1902 = pneg %p219
        $region82: #{tpu_custom_call.1} parent=51 // pred_check_branch
          %1904 = sbr.rel (%p1902) target = $region84
        $region83: #{tpu_custom_call.1} parent=51 // pred_region
          %s1906 = ssub.s32 512, 512
          %1907 = vsyncadd %s1898, %s1906
          %s1908 = smul.addr %s28, 4
          %s1909 = smul.addr %s1908, 128
          %s1910 = scalar_lea.hbm %s8, %s1909
          %s1911 = sshll.u32 %s1901, 4
          %s1912 = int_to_ptr.vmem [resolvable:$true] %s1911
          %1917 = dma.vmem_to_hbm [thread:$0]  %s1912, 512, %s1910, %s1898, 256, 256, 16
        $region84: #{tpu_custom_call.1} parent=51 // pred_fallthru
          _
      $region52: #{tpu_custom_call.1} parent=5 // pred_fallthru
        _
      %p1918 = scmp.le.s32.totalorder 2, %s23
      // Predicated region
      $region85: #{tpu_custom_call.1} parent=5 // pred_check
        %p1919 = pneg %p1918
      $region86: #{tpu_custom_call.1} parent=5 // pred_check_branch
        %1921 = sbr.rel (%p1919) target = $region88
      $region87: #{tpu_custom_call.1} parent=5 // pred_region
        %s1922 = ssub.s32 %s23, 2
        // Predicated region
        $region89: #{tpu_custom_call.1} parent=87 // pred_check
          %p1923 = pneg %p225
        $region90: #{tpu_custom_call.1} parent=87 // pred_check_branch
          %1925 = sbr.rel (%p1923) target = $region92
        $region91: #{tpu_custom_call.1} parent=87 // pred_region
          %s1926 = sand.u32 %s210, 1
          %s1927 = scalar_lea.sflag [#allocation4], %s1926
          %s1928 = sand.u32 %s210, 1
          %s1929 = smul.addr %s1928, 32
          %s1930 = scalar_lea.vmem [#allocation14], %s1929
          %1931 = dma.done %s1927, 512
        $region92: #{tpu_custom_call.1} parent=87 // pred_fallthru
          _
      $region88: #{tpu_custom_call.1} parent=5 // pred_fallthru
        _
    $region6: #{tpu_custom_call.1} parent=1 // loop_footer
      %s27 = sadd.s32 1, %s23
    $region7: #{tpu_custom_call.1} parent=1 // loop_footer_branch
      %22 = sbr.rel target = $region3
    $region8: #{tpu_custom_call.1} parent=1 // loop_exit
      _
    %1932 = vsyncpa [#allocation3], 1
    %s1933 = scalar_lea.sflag [#allocation3], 1
    %1934 = vsyncpa %s1933, 1
    %1935 = vsyncpa [#allocation6], 1
    %1936 = vsyncpa [#allocation9], 1
    %1937 = vsyncpa [#allocation12], 1
    %1938 = vsyncpa [#allocation4], 1
    %s1939 = scalar_lea.sflag [#allocation4], 1
    %1940 = vsyncpa %s1939, 1

</llo_original>
